<compile_context>
chip_gen: v7x
topology: tpu7x:2x2x1
jax: 0.10.0
libtpu: 0.0.40
codegen_flags: <defaults>
</compile_context>

<pallas_src>
import functools
import math

import jax
import jax.numpy as jnp
from jax.experimental import pallas as pl
from jax.experimental.pallas import tpu as pltpu


_COMPUTE_DTYPE = jnp.bfloat16   # MXU input dtype; accumulation stays f32


# --------------------------------------------------------------------------
# kernel 1: fused QKV projection -> q [H,S,dk], kT [H,dk,S], v [H,S,dk]
# --------------------------------------------------------------------------
def _qkv_proj_kernel(nhead, d_k, x_ref, wqkv_ref, bqkv_ref, q_ref, k_ref, v_ref):
    x = x_ref[0]                                            # (ts, D) f32
    ts = x.shape[0]
    d_model = nhead * d_k
    # Projection computed transposed: (3D, D) @ (D, ts) -> (3D, ts).  Splitting
    # heads is then a free major-dim reshape; K needs no transpose at all and
    # Q / V need one batched minor-dim transpose each (well-supported vxpose)
    # instead of 3*H non-aligned lane-slice stores.
    xt = x.T.astype(wqkv_ref.dtype)                         # (D, ts) bf16
    qkv_t = jnp.dot(wqkv_ref[...], xt,
                    preferred_element_type=jnp.float32) + bqkv_ref[...]   # (3D, ts)
    q_t = qkv_t[0 * d_model:1 * d_model].reshape(nhead, d_k, ts)
    k_t = qkv_t[1 * d_model:2 * d_model].reshape(nhead, d_k, ts)
    v_t = qkv_t[2 * d_model:3 * d_model].reshape(nhead, d_k, ts)
    q_ref[0] = jnp.swapaxes(q_t, 1, 2).astype(q_ref.dtype)  # (H, ts, dk), pre-scaled
    k_ref[0] = k_t.astype(k_ref.dtype)                      # (H, dk, ts)  lane-dense
    v_ref[0] = jnp.swapaxes(v_t, 1, 2).astype(v_ref.dtype)  # (H, ts, dk)


# --------------------------------------------------------------------------
# kernel 2: flash attention + out-proj + LN1 + FFN + LN2
# --------------------------------------------------------------------------
def _attn_ffn_kernel(x_ref, q_ref, k_ref, v_ref, bias_ref,
                     wout_ref, bout_ref, w1_ref, b1_ref, w2_ref, b2_ref,
                     g1_ref, be1_ref, g2_ref, be2_ref,
                     o_ref,
                     m_sc, l_sc, acc_sc):
    ki = pl.program_id(2)
    n_kv = pl.num_programs(2)

    @pl.when(ki == 0)
    def _():
        m_sc[...] = jnp.full(m_sc.shape, -jnp.inf, dtype=jnp.float32)
        l_sc[...] = jnp.zeros(l_sc.shape, dtype=jnp.float32)
        acc_sc[...] = jnp.zeros(acc_sc.shape, dtype=jnp.float32)

    q = q_ref[0]      # (H, tq,  dk) bf16, already scaled by 1/sqrt(dk)
    kt = k_ref[0]     # (H, dk, tkv) bf16  (K stored transposed, lane-dense)
    v = v_ref[0]      # (H, tkv, dk) bf16

    # head-batched attention scores on the MXU (natural MXU layouts, f32 acc)
    s = jnp.einsum("hqd,hdk->hqk", q, kt,
                   preferred_element_type=jnp.float32)              # (H, tq, tkv)
    # relative positional bias: pre-computed per-diagonal tile, just add it
    s = s + bias_ref[0].astype(jnp.float32)

    # TODO(synk): tgt_mask / causal masking not wired (reference runs mask=None).

    # ---- online (flash) softmax over kv tiles ----
    m_prev = m_sc[...]                                              # (H, tq, 1)
    m_new = jnp.maximum(m_prev, jnp.max(s, axis=-1, keepdims=True))
    alpha = jnp.exp(m_prev - m_new)
    p = jnp.exp(s - m_new)                                          # (H, tq, tkv)
    l_sc[...] = alpha * l_sc[...] + jnp.sum(p, axis=-1, keepdims=True)
    acc_sc[...] = alpha * acc_sc[...] + jnp.einsum(
        "hqk,hkd->hqd", p.astype(v.dtype), v, preferred_element_type=jnp.float32)
    m_sc[...] = m_new

    # ---- epilogue once per q tile: out-proj + residual/LN1 + FFN + residual/LN2 ----
    @pl.when(ki == n_kv - 1)
    def _():
        attn = (acc_sc[...] / l_sc[...]).astype(wout_ref.dtype)     # (H, tq, dk)
        # out-projection: head-batched MXU matmul + leading-axis reduce (cheap
        # vreg adds, no cross-lane movement) -- replaces the serialized
        # per-head accumulate chain.
        sa_h = jnp.einsum("hqd,hdm->hqm", attn, wout_ref[...],
                          preferred_element_type=jnp.float32)       # (H, tq, D)
        sa = jnp.sum(sa_h, axis=0) + bout_ref[0]                    # (tq, D)

        x = x_ref[0]                                                # (tq, D) f32
        x1 = x + sa
        mu1 = jnp.mean(x1, axis=-1, keepdims=True)
        var1 = jnp.mean((x1 - mu1) ** 2, axis=-1, keepdims=True)
        x1n = (x1 - mu1) * jax.lax.rsqrt(var1 + 1e-5) * g1_ref[0] + be1_ref[0]

        h1 = jnp.dot(x1n.astype(w1_ref.dtype), w1_ref[...],
                     preferred_element_type=jnp.float32) + b1_ref[0]
        h1 = jnp.maximum(h1, 0.0)
        ff = jnp.dot(h1.astype(w2_ref.dtype), w2_ref[...],
                     preferred_element_type=jnp.float32) + b2_ref[0]

        x2 = x1n + ff
        mu2 = jnp.mean(x2, axis=-1, keepdims=True)
        var2 = jnp.mean((x2 - mu2) ** 2, axis=-1, keepdims=True)
        o_ref[0] = ((x2 - mu2) * jax.lax.rsqrt(var2 + 1e-5) * g2_ref[0]
                    + be2_ref[0]).astype(o_ref.dtype)


# --------------------------------------------------------------------------
# wrapper
# --------------------------------------------------------------------------
def _vmem_limit(block_bytes):
    """Scoped-VMEM request: estimated footprint + headroom, capped under physical."""
    try:
        phys = pltpu.get_tpu_info().vmem_capacity_bytes
    except Exception:  # query unavailable -> conservative v7x assumption
        phys = 64 << 20
    return int(min(max(block_bytes + (8 << 20), 16 << 20), phys - (4 << 20)))


def relative_decoder_layer(x, params, nhead, max_rel_dist):
    """x: [bsz, seq, d_model] float32 -> [bsz, seq, d_model] float32."""
    bsz, seq, d_model = x.shape
    d_k = d_model // nhead
    ffn = params["w1"].shape[0]
    cdt = _COMPUTE_DTYPE

    # Tile sizes: 128 is a good default across generations (fills v5e's MXU and
    # keeps bsz * n_q >= 2 independent units for v7x megacore; v6e can go to
    # 256 when bsz * n_q stays >= 2).  Tiny demo shapes use the full sequence.
    ts = seq if seq <= 256 else 256
    tq = tkv = seq if seq <= 128 else 128
    assert seq % ts == 0 and seq % tq == 0 and tq == tkv

    n_q = seq // tq
    n_kv = seq // tkv

    # Fold the 1/sqrt(d_k) softmax scale into the Q rows of the QKV projection
    # (applied once per token instead of once per (q, kv) tile pair).
    scale = 1.0 / math.sqrt(d_k)
    row_scale = jnp.concatenate(
        [jnp.full((d_model,), scale, jnp.float32),
         jnp.ones((2 * d_model,), jnp.float32)])
    wqkv_s = (params["wqkv"] * row_scale[:, None]).astype(cdt)            # (3D, D)
    bqkv_s = (params["bqkv"] * row_scale)[:, None].astype(jnp.float32)    # (3D, 1)

    wout_h = params["wout"].T.reshape(nhead, d_k, d_model).astype(cdt)    # (H, dk, D)
    w1_t = params["w1"].T.astype(cdt)                                     # (D, F)
    w2_t = params["w2"].T.astype(cdt)                                     # (F, D)
    bout = params["bout"][None, :].astype(jnp.float32)
    b1 = params["b1"][None, :].astype(jnp.float32)
    b2 = params["b2"][None, :].astype(jnp.float32)
    g1 = params["ln1_g"][None, :].astype(jnp.float32)
    be1 = params["ln1_b"][None, :].astype(jnp.float32)
    g2 = params["ln2_g"][None, :].astype(jnp.float32)
    be2 = params["ln2_b"][None, :].astype(jnp.float32)

    # Relative-bias tiles precomputed per (qi - ki) diagonal.  With tq == tkv
    # the (tq, tkv) tile content depends only on the tile-offset difference,
    # so only n_q + n_kv - 1 tiles (O(S * H * tkv) elems, bf16) are needed
    # instead of a dense O(H * S^2) table, and the kernel does a single add.
    n_diag = n_q + n_kv - 1
    delta = (jnp.arange(n_diag) - (n_kv - 1)) * tq                        # (T,)
    rel = (delta[:, None, None]
           + jnp.arange(tq)[None, :, None]
           - jnp.arange(tkv)[None, None, :])                              # (T, tq, tkv)
    relc = jnp.clip(rel + max_rel_dist, 0, 2 * max_rel_dist)
    bias_tiles = jnp.transpose(params["rel_bias"][relc],
                               (0, 3, 1, 2)).astype(cdt)                  # (T, H, tq, tkv)

    def run(single_buffer_weights):
        def const_spec(shape, index_map):
            # Grid-invariant operand: request a single VMEM buffer to halve the
            # resident weight footprint (Pallas double-buffers by default).
            if single_buffer_weights:
                return pl.BlockSpec(shape, index_map, pipeline_mode=pl.Buffered(1))
            return pl.BlockSpec(shape, index_map)

        # ---------------- kernel 1: fused QKV projection ----------------
        k1_bytes = (2 * (ts * d_model * 4 + 3 * ts * d_model * 2)   # x + q/kT/v blocks (dbl buf)
                    + 3 * d_model * d_model * 2 + 3 * d_model * 4   # wqkv + bqkv
                    + 4 * 3 * d_model * ts * 4)                     # f32 matmul / transpose temps
        qv_struct = jax.ShapeDtypeStruct((bsz, nhead, seq, d_k), cdt)
        kt_struct = jax.ShapeDtypeStruct((bsz, nhead, d_k, seq), cdt)
        q, k, v = pl.pallas_call(
            functools.partial(_qkv_proj_kernel, nhead, d_k),
            out_shape=(qv_struct, kt_struct, qv_struct),
            grid=(bsz, seq // ts),
            in_specs=[
                pl.BlockSpec((1, ts, d_model), lambda b, s: (b, s, 0)),        # x
                const_spec((3 * d_model, d_model), lambda b, s: (0, 0)),       # wqkv (q-scaled)
                const_spec((3 * d_model, 1), lambda b, s: (0, 0)),             # bqkv (q-scaled)
            ],
            out_specs=[
                pl.BlockSpec((1, nhead, ts, d_k), lambda b, s: (b, 0, s, 0)),  # q
                pl.BlockSpec((1, nhead, d_k, ts), lambda b, s: (b, 0, 0, s)),  # kT
                pl.BlockSpec((1, nhead, ts, d_k), lambda b, s: (b, 0, s, 0)),  # v
            ],
            compiler_params=pltpu.CompilerParams(
                dimension_semantics=("parallel", "parallel"),
                vmem_limit_bytes=_vmem_limit(k1_bytes)),
        )(x, wqkv_s, bqkv_s)

        # ------- kernel 2: flash attention + out-proj + LN1 + FFN + LN2 -------
        k2_bytes = (
            2 * (tq * d_model * 4                       # x residual tile
                 + nhead * tq * d_k * 2                 # q tile
                 + nhead * d_k * tkv * 2                # kT tile
                 + nhead * tkv * d_k * 2                # v tile
                 + nhead * tq * tkv * 2                 # bias tile
                 + tq * d_model * 4)                    # output tile
            + nhead * d_k * d_model * 2 + 2 * d_model * ffn * 2   # wout, w1, w2
            + (7 * d_model + ffn) * 4                             # biases + LN params
            + nhead * tq * (d_k + 2) * 4                          # flash accumulators
            + 3 * nhead * tq * tkv * 4                            # f32 score / exp temps
            + nhead * tq * d_model * 4 + tq * ffn * 4)            # epilogue temps
        out = pl.pallas_call(
            _attn_ffn_kernel,
            out_shape=jax.ShapeDtypeStruct((bsz, seq, d_model), jnp.float32),
            grid=(bsz, n_q, n_kv),
            in_specs=[
                pl.BlockSpec((1, tq, d_model), lambda b, i, j: (b, i, 0)),          # x
                pl.BlockSpec((1, nhead, tq, d_k), lambda b, i, j: (b, 0, i, 0)),    # q
                pl.BlockSpec((1, nhead, d_k, tkv), lambda b, i, j: (b, 0, 0, j)),   # kT
                pl.BlockSpec((1, nhead, tkv, d_k), lambda b, i, j: (b, 0, j, 0)),   # v
                pl.BlockSpec((1, nhead, tq, tkv),                                   # bias tile
                             lambda b, i, j: (i - j + (n_kv - 1), 0, 0, 0)),
                const_spec((nhead, d_k, d_model), lambda b, i, j: (0, 0, 0)),       # wout (head-split)
                const_spec((1, d_model), lambda b, i, j: (0, 0)),                   # bout
                const_spec((d_model, ffn), lambda b, i, j: (0, 0)),                 # w1^T
                const_spec((1, ffn), lambda b, i, j: (0, 0)),                       # b1
                const_spec((ffn, d_model), lambda b, i, j: (0, 0)),                 # w2^T
                const_spec((1, d_model), lambda b, i, j: (0, 0)),                   # b2
                const_spec((1, d_model), lambda b, i, j: (0, 0)),                   # ln1 gamma
                const_spec((1, d_model), lambda b, i, j: (0, 0)),                   # ln1 beta
                const_spec((1, d_model), lambda b, i, j: (0, 0)),                   # ln2 gamma
                const_spec((1, d_model), lambda b, i, j: (0, 0)),                   # ln2 beta
            ],
            out_specs=pl.BlockSpec((1, tq, d_model), lambda b, i, j: (b, i, 0)),
            scratch_shapes=[
                pltpu.VMEM((nhead, tq, 1), jnp.float32),     # running max
                pltpu.VMEM((nhead, tq, 1), jnp.float32),     # running denominator
                pltpu.VMEM((nhead, tq, d_k), jnp.float32),   # output accumulator
            ],
            compiler_params=pltpu.CompilerParams(
                dimension_semantics=("parallel", "parallel", "arbitrary"),
                vmem_limit_bytes=_vmem_limit(k2_bytes)),
        )(x, q, k, v, bias_tiles, wout_h, bout, w1_t, b1, w2_t, b2,
          g1, be1, g2, be2)
        return out

    try:
        return run(single_buffer_weights=True)
    except Exception:
        # pl.Buffered(1) not supported by this jax/libtpu build -> fall back to
        # default double buffering (correctness unaffected).
        return run(single_buffer_weights=False)


# --------------------------------------------------------------------------
# pure-JAX reference (mirrors the PyTorch forward; dropout = identity)
# --------------------------------------------------------------------------
def reference_layer(x, params, nhead, max_rel_dist):
    bsz, S, D = x.shape
    d_k = D // nhead

    qkv = x @ params["wqkv"].T + params["bqkv"]                 # (B,S,3D)
    qkv = qkv.reshape(bsz, S, 3, nhead, d_k)
    q, k, v = qkv[:, :, 0], qkv[:, :, 1], qkv[:, :, 2]          # (B,S,H,dk)
    q = jnp.transpose(q, (0, 2, 1, 3)).reshape(bsz * nhead, S, d_k)
    k = jnp.transpose(k, (0, 2, 1, 3)).reshape(bsz * nhead, S, d_k)
    v = jnp.transpose(v, (0, 2, 1, 3)).reshape(bsz * nhead, S, d_k)
    scores = jnp.einsum("bqd,bkd->bqk", q, k) / math.sqrt(d_k)

    idxs = jnp.arange(S)
    rel = idxs[:, None] - idxs[None, :]
    rel_clamped = jnp.clip(rel + max_rel_dist, 0, 2 * max_rel_dist)
    bias = params["rel_bias"][rel_clamped]                      # (S,S,H)
    bias = jnp.transpose(bias, (2, 0, 1))                       # (H,S,S)
    bias = jnp.tile(bias, (bsz, 1, 1))                          # (B*H,S,S)
    scores = scores + bias

    attn = jax.nn.softmax(scores, axis=-1)
    out = jnp.einsum("bqk,bkd->bqd", attn, v)
    out = out.reshape(bsz, nhead, S, d_k)
    out = jnp.transpose(out, (0, 2, 1, 3)).reshape(bsz, S, D)
    sa = out @ params["wout"].T + params["bout"]

    def ln(y, g, b):
        mu = jnp.mean(y, axis=-1, keepdims=True)
        var = jnp.mean((y - mu) ** 2, axis=-1, keepdims=True)
        return (y - mu) * jax.lax.rsqrt(var + 1e-5) * g + b

    x1 = ln(x + sa, params["ln1_g"], params["ln1_b"])
    ff = jnp.maximum(x1 @ params["w1"].T + params["b1"], 0.0) @ params["w2"].T + params["b2"]
    return ln(x1 + ff, params["ln2_g"], params["ln2_b"])


def init_params(key, d_model, nhead, dim_feedforward, max_rel_dist):
    ks = jax.random.split(key, 8)

    def lin(k, fan_out, fan_in):
        bound = 1.0 / math.sqrt(fan_in)
        kw, kb = jax.random.split(k)
        w = jax.random.uniform(kw, (fan_out, fan_in), jnp.float32, -bound, bound)
        b = jax.random.uniform(kb, (fan_out,), jnp.float32, -bound, bound)
        return w, b

    wqkv, bqkv = lin(ks[0], 3 * d_model, d_model)
    wout, bout = lin(ks[1], d_model, d_model)
    w1, b1 = lin(ks[2], dim_feedforward, d_model)
    w2, b2 = lin(ks[3], d_model, dim_feedforward)
    # PyTorch inits rel_bias to zeros; use small random values so the relative
    # bias path is actually exercised (deterministic, in-script).
    rel_bias = 0.02 * jax.random.normal(ks[4], (2 * max_rel_dist + 1, nhead),
                                        jnp.float32)
    return {
        "wqkv": wqkv, "bqkv": bqkv,
        "wout": wout, "bout": bout,
        "w1": w1, "b1": b1,
        "w2": w2, "b2": b2,
        "ln1_g": jnp.ones((d_model,), jnp.float32),
        "ln1_b": jnp.zeros((d_model,), jnp.float32),
        "ln2_g": jnp.ones((d_model,), jnp.float32),
        "ln2_b": jnp.zeros((d_model,), jnp.float32),
        "rel_bias": rel_bias,
    }


if __name__ == "__main__":
    bsz, seq, d_model = 2, 8, 32
    nhead, dim_feedforward, max_rel_dist = 4, 64, 16

    key = jax.random.PRNGKey(0)
    kx, kp = jax.random.split(key)
    x = jax.random.normal(kx, (bsz, seq, d_model), jnp.float32)
    params = init_params(kp, d_model, nhead, dim_feedforward, max_rel_dist)

    out = relative_decoder_layer(x, params, nhead, max_rel_dist)
    out = jax.block_until_ready(out)

    ref = reference_layer(x, params, nhead, max_rel_dist)
    assert out.shape == (bsz, seq, d_model)
    # bf16 MXU inputs (f32 accumulation) vs a pure-f32 reference -> loose tol.
    assert jnp.allclose(out, ref, atol=5e-2, rtol=5e-2), "mismatch vs reference"

    print("KERNEL_OK")
</pallas_src>

<mosaic_0001>
module attributes {stable_mosaic.version = 11 : i64} {
  func.func @_qkv_proj_kernel(%arg0: i32, %arg1: i32, %arg2: memref<1x8x32xf32, #tpu.memory_space<vmem>>, %arg3: memref<96x32xbf16, #tpu.memory_space<vmem>>, %arg4: memref<96x1xf32, #tpu.memory_space<vmem>>, %arg5: memref<1x4x8x8xbf16, #tpu.memory_space<vmem>>, %arg6: memref<1x4x8x8xbf16, #tpu.memory_space<vmem>>, %arg7: memref<1x4x8x8xbf16, #tpu.memory_space<vmem>>) attributes {dimension_semantics = [#tpu.dimension_semantics<parallel>, #tpu.dimension_semantics<parallel>], iteration_bounds = array<i64: 2, 1>, scalar_prefetch = 0 : i64, scratch_operands = 0 : i64, tpu.core_type = #tpu.core_type<tc>, window_params = [{transform_indices = @transform_0, window_bounds = array<i64: 1, 8, 32>}, {pipeline_mode = #tpu.pipeline_mode<synchronous>, transform_indices = @transform_1, window_bounds = array<i64: 96, 32>}, {pipeline_mode = #tpu.pipeline_mode<synchronous>, transform_indices = @transform_2, window_bounds = array<i64: 96, 1>}, {transform_indices = @transform_3, window_bounds = array<i64: 1, 4, 8, 8>}, {transform_indices = @transform_4, window_bounds = array<i64: 1, 4, 8, 8>}, {transform_indices = @transform_5, window_bounds = array<i64: 1, 4, 8, 8>}]} {
    %c0 = arith.constant 0 : index
    %c0_0 = arith.constant 0 : index
    %c0_1 = arith.constant 0 : index
    %0 = vector.load %arg2[%c0, %c0_0, %c0_1] : memref<1x8x32xf32, #tpu.memory_space<vmem>>, vector<1x8x32xf32>
    %1 = vector.shape_cast %0 : vector<1x8x32xf32> to vector<8x32xf32>
    %2 = tpu.transpose %1, [1, 0] : vector<8x32xf32> -> vector<32x8xf32>
    %3 = arith.truncf %2 : vector<32x8xf32> to vector<32x8xbf16>
    %c0_2 = arith.constant 0 : index
    %c0_3 = arith.constant 0 : index
    %4 = vector.load %arg3[%c0_2, %c0_3] : memref<96x32xbf16, #tpu.memory_space<vmem>>, vector<96x32xbf16>
    %cst = arith.constant dense<0.000000e+00> : vector<96x8xf32>
    %5 = tpu.matmul %4, %3, %cst {dimension_numbers = #tpu.dot_dimension_numbers<[1], [0], [0], [1], [0, 0, 1, 1], [], []>} : vector<96x32xbf16>, vector<32x8xbf16>, vector<96x8xf32> -> vector<96x8xf32>
    %c0_4 = arith.constant 0 : index
    %c0_5 = arith.constant 0 : index
    %6 = vector.load %arg4[%c0_4, %c0_5] : memref<96x1xf32, #tpu.memory_space<vmem>>, vector<96x1xf32>
    %7 = vector.broadcast %6 : vector<96x1xf32> to vector<96x8xf32>
    %8 = arith.addf %5, %7 : vector<96x8xf32>
    %9 = vector.extract_strided_slice %8 {offsets = [0, 0], sizes = [32, 8], strides = [1, 1]} : vector<96x8xf32> to vector<32x8xf32>
    %10 = vector.shape_cast %9 : vector<32x8xf32> to vector<4x8x8xf32>
    %11 = vector.extract_strided_slice %8 {offsets = [32, 0], sizes = [32, 8], strides = [1, 1]} : vector<96x8xf32> to vector<32x8xf32>
    %12 = vector.shape_cast %11 : vector<32x8xf32> to vector<4x8x8xf32>
    %13 = vector.extract_strided_slice %8 {offsets = [64, 0], sizes = [32, 8], strides = [1, 1]} : vector<96x8xf32> to vector<32x8xf32>
    %14 = vector.shape_cast %13 : vector<32x8xf32> to vector<4x8x8xf32>
    %15 = tpu.transpose %10, [0, 2, 1] : vector<4x8x8xf32> -> vector<4x8x8xf32>
    %16 = arith.truncf %15 : vector<4x8x8xf32> to vector<4x8x8xbf16>
    %c0_6 = arith.constant 0 : index
    %c0_7 = arith.constant 0 : index
    %c0_8 = arith.constant 0 : index
    %c0_9 = arith.constant 0 : index
    %17 = vector.load %arg5[%c0_6, %c0_7, %c0_8, %c0_9] : memref<1x4x8x8xbf16, #tpu.memory_space<vmem>>, vector<1x4x8x8xbf16>
    %18 = vector.shape_cast %17 : vector<1x4x8x8xbf16> to vector<4x8x8xbf16>
    %19 = vector.shape_cast %16 : vector<4x8x8xbf16> to vector<1x4x8x8xbf16>
    tpu.vector_store %arg5[%c0_6, %c0_7, %c0_8, %c0_9], %19 {strides = array<i32>} : memref<1x4x8x8xbf16, #tpu.memory_space<vmem>>, vector<1x4x8x8xbf16>,
    %20 = arith.truncf %12 : vector<4x8x8xf32> to vector<4x8x8xbf16>
    %c0_10 = arith.constant 0 : index
    %c0_11 = arith.constant 0 : index
    %c0_12 = arith.constant 0 : index
    %c0_13 = arith.constant 0 : index
    %21 = vector.load %arg6[%c0_10, %c0_11, %c0_12, %c0_13] : memref<1x4x8x8xbf16, #tpu.memory_space<vmem>>, vector<1x4x8x8xbf16>
    %22 = vector.shape_cast %21 : vector<1x4x8x8xbf16> to vector<4x8x8xbf16>
    %23 = vector.shape_cast %20 : vector<4x8x8xbf16> to vector<1x4x8x8xbf16>
    tpu.vector_store %arg6[%c0_10, %c0_11, %c0_12, %c0_13], %23 {strides = array<i32>} : memref<1x4x8x8xbf16, #tpu.memory_space<vmem>>, vector<1x4x8x8xbf16>,
    %24 = tpu.transpose %14, [0, 2, 1] : vector<4x8x8xf32> -> vector<4x8x8xf32>
    %25 = arith.truncf %24 : vector<4x8x8xf32> to vector<4x8x8xbf16>
    %c0_14 = arith.constant 0 : index
    %c0_15 = arith.constant 0 : index
    %c0_16 = arith.constant 0 : index
    %c0_17 = arith.constant 0 : index
    %26 = vector.load %arg7[%c0_14, %c0_15, %c0_16, %c0_17] : memref<1x4x8x8xbf16, #tpu.memory_space<vmem>>, vector<1x4x8x8xbf16>
    %27 = vector.shape_cast %26 : vector<1x4x8x8xbf16> to vector<4x8x8xbf16>
    %28 = vector.shape_cast %25 : vector<4x8x8xbf16> to vector<1x4x8x8xbf16>
    tpu.vector_store %arg7[%c0_14, %c0_15, %c0_16, %c0_17], %28 {strides = array<i32>} : memref<1x4x8x8xbf16, #tpu.memory_space<vmem>>, vector<1x4x8x8xbf16>,
    return
  }
  func.func @transform_0(%arg0: i32, %arg1: i32) -> (i32, i32, i32) {
    %c0_i32 = arith.constant 0 : i32
    %c0_i32_0 = arith.constant 0 : i32
    return %arg0, %arg1, %c0_i32 : i32, i32, i32
  }
  func.func @transform_1(%arg0: i32, %arg1: i32) -> (i32, i32) {
    %c0_i32 = arith.constant 0 : i32
    %c0_i32_0 = arith.constant 0 : i32
    %c0_i32_1 = arith.constant 0 : i32
    return %c0_i32, %c0_i32_0 : i32, i32
  }
  func.func @transform_2(%arg0: i32, %arg1: i32) -> (i32, i32) {
    %c0_i32 = arith.constant 0 : i32
    %c0_i32_0 = arith.constant 0 : i32
    %c0_i32_1 = arith.constant 0 : i32
    return %c0_i32, %c0_i32_0 : i32, i32
  }
  func.func @transform_3(%arg0: i32, %arg1: i32) -> (i32, i32, i32, i32) {
    %c0_i32 = arith.constant 0 : i32
    %c0_i32_0 = arith.constant 0 : i32
    %c0_i32_1 = arith.constant 0 : i32
    return %arg0, %c0_i32, %arg1, %c0_i32_0 : i32, i32, i32, i32
  }
  func.func @transform_4(%arg0: i32, %arg1: i32) -> (i32, i32, i32, i32) {
    %c0_i32 = arith.constant 0 : i32
    %c0_i32_0 = arith.constant 0 : i32
    %c0_i32_1 = arith.constant 0 : i32
    return %arg0, %c0_i32, %c0_i32_0, %arg1 : i32, i32, i32, i32
  }
  func.func @transform_5(%arg0: i32, %arg1: i32) -> (i32, i32, i32, i32) {
    %c0_i32 = arith.constant 0 : i32
    %c0_i32_0 = arith.constant 0 : i32
    %c0_i32_1 = arith.constant 0 : i32
    return %arg0, %c0_i32, %arg1, %c0_i32_0 : i32, i32, i32, i32
  }
}

module attributes {stable_mosaic.version = 11 : i64} {
  func.func @_qkv_proj_kernel(%arg0: i32, %arg1: i32, %arg2: memref<1x8x32xf32, #tpu.memory_space<vmem>>, %arg3: memref<96x32xbf16, #tpu.memory_space<vmem>>, %arg4: memref<96x1xf32, #tpu.memory_space<vmem>>, %arg5: memref<1x4x8x8xbf16, #tpu.memory_space<vmem>>, %arg6: memref<1x4x8x8xbf16, #tpu.memory_space<vmem>>, %arg7: memref<1x4x8x8xbf16, #tpu.memory_space<vmem>>) attributes {dimension_semantics = [#tpu.dimension_semantics<parallel>, #tpu.dimension_semantics<parallel>], iteration_bounds = array<i64: 2, 1>, scalar_prefetch = 0 : i64, scratch_operands = 0 : i64, tpu.core_type = #tpu.core_type<tc>, window_params = [{transform_indices = @transform_0, window_bounds = array<i64: 1, 8, 32>}, {pipeline_mode = #tpu.pipeline_mode<synchronous>, transform_indices = @transform_1, window_bounds = array<i64: 96, 32>}, {pipeline_mode = #tpu.pipeline_mode<synchronous>, transform_indices = @transform_2, window_bounds = array<i64: 96, 1>}, {transform_indices = @transform_3, window_bounds = array<i64: 1, 4, 8, 8>}, {transform_indices = @transform_4, window_bounds = array<i64: 1, 4, 8, 8>}, {transform_indices = @transform_5, window_bounds = array<i64: 1, 4, 8, 8>}]} {
    %c0 = arith.constant 0 : index
    %c0_0 = arith.constant 0 : index
    %c0_1 = arith.constant 0 : index
    %0 = vector.load %arg2[%c0, %c0_0, %c0_1] : memref<1x8x32xf32, #tpu.memory_space<vmem>>, vector<1x8x32xf32>
    %1 = vector.shape_cast %0 : vector<1x8x32xf32> to vector<8x32xf32>
    %2 = tpu.transpose %1, [1, 0] : vector<8x32xf32> -> vector<32x8xf32>
    %3 = arith.truncf %2 : vector<32x8xf32> to vector<32x8xbf16>
    %c0_2 = arith.constant 0 : index
    %c0_3 = arith.constant 0 : index
    %4 = vector.load %arg3[%c0_2, %c0_3] : memref<96x32xbf16, #tpu.memory_space<vmem>>, vector<96x32xbf16>
    %cst = arith.constant dense<0.000000e+00> : vector<96x8xf32>
    %5 = tpu.matmul %4, %3, %cst {dimension_numbers = #tpu.dot_dimension_numbers<[1], [0], [0], [1], [0, 0, 1, 1], [], []>} : vector<96x32xbf16>, vector<32x8xbf16>, vector<96x8xf32> -> vector<96x8xf32>
    %c0_4 = arith.constant 0 : index
    %c0_5 = arith.constant 0 : index
    %6 = vector.load %arg4[%c0_4, %c0_5] : memref<96x1xf32, #tpu.memory_space<vmem>>, vector<96x1xf32>
    %7 = vector.broadcast %6 : vector<96x1xf32> to vector<96x8xf32>
    %8 = arith.addf %5, %7 : vector<96x8xf32>
    %9 = vector.extract_strided_slice %8 {offsets = [0, 0], sizes = [32, 8], strides = [1, 1]} : vector<96x8xf32> to vector<32x8xf32>
    %10 = vector.shape_cast %9 : vector<32x8xf32> to vector<4x8x8xf32>
    %11 = vector.extract_strided_slice %8 {offsets = [32, 0], sizes = [32, 8], strides = [1, 1]} : vector<96x8xf32> to vector<32x8xf32>
    %12 = vector.shape_cast %11 : vector<32x8xf32> to vector<4x8x8xf32>
    %13 = vector.extract_strided_slice %8 {offsets = [64, 0], sizes = [32, 8], strides = [1, 1]} : vector<96x8xf32> to vector<32x8xf32>
    %14 = vector.shape_cast %13 : vector<32x8xf32> to vector<4x8x8xf32>
    %15 = tpu.transpose %10, [0, 2, 1] : vector<4x8x8xf32> -> vector<4x8x8xf32>
    %16 = arith.truncf %15 : vector<4x8x8xf32> to vector<4x8x8xbf16>
    %c0_6 = arith.constant 0 : index
    %c0_7 = arith.constant 0 : index
    %c0_8 = arith.constant 0 : index
    %c0_9 = arith.constant 0 : index
    %17 = vector.load %arg5[%c0_6, %c0_7, %c0_8, %c0_9] : memref<1x4x8x8xbf16, #tpu.memory_space<vmem>>, vector<1x4x8x8xbf16>
    %18 = vector.shape_cast %17 : vector<1x4x8x8xbf16> to vector<4x8x8xbf16>
    %19 = vector.shape_cast %16 : vector<4x8x8xbf16> to vector<1x4x8x8xbf16>
    tpu.vector_store %arg5[%c0_6, %c0_7, %c0_8, %c0_9], %19 {strides = array<i32>} : memref<1x4x8x8xbf16, #tpu.memory_space<vmem>>, vector<1x4x8x8xbf16>,
    %20 = arith.truncf %12 : vector<4x8x8xf32> to vector<4x8x8xbf16>
    %c0_10 = arith.constant 0 : index
    %c0_11 = arith.constant 0 : index
    %c0_12 = arith.constant 0 : index
    %c0_13 = arith.constant 0 : index
    %21 = vector.load %arg6[%c0_10, %c0_11, %c0_12, %c0_13] : memref<1x4x8x8xbf16, #tpu.memory_space<vmem>>, vector<1x4x8x8xbf16>
    %22 = vector.shape_cast %21 : vector<1x4x8x8xbf16> to vector<4x8x8xbf16>
    %23 = vector.shape_cast %20 : vector<4x8x8xbf16> to vector<1x4x8x8xbf16>
    tpu.vector_store %arg6[%c0_10, %c0_11, %c0_12, %c0_13], %23 {strides = array<i32>} : memref<1x4x8x8xbf16, #tpu.memory_space<vmem>>, vector<1x4x8x8xbf16>,
    %24 = tpu.transpose %14, [0, 2, 1] : vector<4x8x8xf32> -> vector<4x8x8xf32>
    %25 = arith.truncf %24 : vector<4x8x8xf32> to vector<4x8x8xbf16>
    %c0_14 = arith.constant 0 : index
    %c0_15 = arith.constant 0 : index
    %c0_16 = arith.constant 0 : index
    %c0_17 = arith.constant 0 : index
    %26 = vector.load %arg7[%c0_14, %c0_15, %c0_16, %c0_17] : memref<1x4x8x8xbf16, #tpu.memory_space<vmem>>, vector<1x4x8x8xbf16>
    %27 = vector.shape_cast %26 : vector<1x4x8x8xbf16> to vector<4x8x8xbf16>
    %28 = vector.shape_cast %25 : vector<4x8x8xbf16> to vector<1x4x8x8xbf16>
    tpu.vector_store %arg7[%c0_14, %c0_15, %c0_16, %c0_17], %28 {strides = array<i32>} : memref<1x4x8x8xbf16, #tpu.memory_space<vmem>>, vector<1x4x8x8xbf16>,
    return
  }
  func.func @transform_0(%arg0: i32, %arg1: i32) -> (i32, i32, i32) {
    %c0_i32 = arith.constant 0 : i32
    %c0_i32_0 = arith.constant 0 : i32
    return %arg0, %arg1, %c0_i32 : i32, i32, i32
  }
  func.func @transform_1(%arg0: i32, %arg1: i32) -> (i32, i32) {
    %c0_i32 = arith.constant 0 : i32
    %c0_i32_0 = arith.constant 0 : i32
    %c0_i32_1 = arith.constant 0 : i32
    return %c0_i32, %c0_i32_0 : i32, i32
  }
  func.func @transform_2(%arg0: i32, %arg1: i32) -> (i32, i32) {
    %c0_i32 = arith.constant 0 : i32
    %c0_i32_0 = arith.constant 0 : i32
    %c0_i32_1 = arith.constant 0 : i32
    return %c0_i32, %c0_i32_0 : i32, i32
  }
  func.func @transform_3(%arg0: i32, %arg1: i32) -> (i32, i32, i32, i32) {
    %c0_i32 = arith.constant 0 : i32
    %c0_i32_0 = arith.constant 0 : i32
    %c0_i32_1 = arith.constant 0 : i32
    return %arg0, %c0_i32, %arg1, %c0_i32_0 : i32, i32, i32, i32
  }
  func.func @transform_4(%arg0: i32, %arg1: i32) -> (i32, i32, i32, i32) {
    %c0_i32 = arith.constant 0 : i32
    %c0_i32_0 = arith.constant 0 : i32
    %c0_i32_1 = arith.constant 0 : i32
    return %arg0, %c0_i32, %c0_i32_0, %arg1 : i32, i32, i32, i32
  }
  func.func @transform_5(%arg0: i32, %arg1: i32) -> (i32, i32, i32, i32) {
    %c0_i32 = arith.constant 0 : i32
    %c0_i32_0 = arith.constant 0 : i32
    %c0_i32_1 = arith.constant 0 : i32
    return %arg0, %c0_i32, %arg1, %c0_i32_0 : i32, i32, i32, i32
  }
}

</mosaic_0001>

<llo_original>
// kernel: tpu_custom_call.1
$region0: #{tpu_custom_call.1}
  #allocation0 [shape = 'u32[]', space=smem, size = 0x4, offset = 0x4, fixed_abs, tag = 'smem constant byte address 0x4 - core index']
  #allocation1 [shape = 'u32[144,128]{1,0:T(1,128)}', space=vmem, size = 0x12000, scoped, tag = 'internal scratch']
  %s0 = inlined_call_operand.vmem [shape: f32[2,8,32], index: 0, kind: input, shape index: {}]
  %s1 = inlined_call_operand.vmem [shape: bf16[96,32], index: 1, kind: input, shape index: {}]
  %s2 = inlined_call_operand.vmem [shape: f32[96,1], index: 2, kind: input, shape index: {}]
  %s3 = inlined_call_operand.hbm [shape: bf16[2,4,8,8], index: 3, kind: output, shape index: {0}]
  %s4 = inlined_call_operand.hbm [shape: bf16[2,4,8,8], index: 4, kind: output, shape index: {1}]
  %s5 = inlined_call_operand.hbm [shape: bf16[2,4,8,8], index: 5, kind: output, shape index: {2}]
  %6 = xla_tuple %s3, %s4, %s5
  %s7 = sld [smem:[#allocation0]]
  $region61: #{tpu_custom_call.1} parent=0
    _
  %s9 = ssub.s32 1, %s7
  %s10 = scalar_select 0, %s9, %s7
  $region1: #{tpu_custom_call.1} parent=0
    #allocation2 [shape = 'u8[16384]{0}', space=vmem, size = 0x4000, scoped, tag = 'output window, operand 0']
    #allocation3 [shape = 's32[2]{0}', space=sflag, size = 0x8, scoped, tag = 'scoped memory for tpu_custom_call.1']
    #allocation4 [shape = 'u8[16384]{0}', space=vmem, size = 0x4000, scoped, tag = 'output window, operand 1']
    #allocation5 [shape = 's32[2]{0}', space=sflag, size = 0x8, scoped, tag = 'scoped memory for tpu_custom_call.1']
    #allocation6 [shape = 'u8[16384]{0}', space=vmem, size = 0x4000, scoped, tag = 'output window, operand 2']
    %11 = vsyncpa [#allocation3], 0
    %s12 = scalar_lea.sflag [#allocation3], 1
    %13 = vsyncpa %s12, 0
    %14 = vsyncpa [#allocation5], 0
    %s15 = scalar_lea.sflag [#allocation5], 1
    %16 = vsyncpa %s15, 0
    loop: start=0, step=1, limit=4
    $region2: #{tpu_custom_call.1} parent=1 // loop_pre_header
      _
    $region3: #{tpu_custom_call.1} parent=1 // loop_header
      %s18 = sphi 0, %s22
      %p19 = scmp.ge.s32.totalorder %s18, 4
      %s25 = sphi 0, %s37
      %s26 = sphi 0, %s33
      %s27 = sphi 0, %s25
      %s28 = sphi 0, %s26
      %s29 = sphi 0, %s27
      %s30 = sphi 0, %s28
      %s42 = sphi 0, %s44
      %s45 = sphi 0, %s42
      %s46 = sphi 0, %s45
      %s62 = sphi 0, %s46
      %s66 = sphi 0, %s66
      %s68 = sphi 0, %s66
      %s69 = sphi 0, %s68
      %s83 = sphi 0, %s69
      %s87 = sphi 0, %s87
      %s89 = sphi 0, %s87
      %s90 = sphi 0, %s89
      %s104 = sphi 0, %s90
      %s112 = sphi 0, %s114
      %s115 = sphi 0, %s112
      %s116 = sphi 0, %s115
      %s132 = sphi 0, %s116
      %s140 = sphi 0, %s142
      %s143 = sphi 0, %s140
      %s144 = sphi 0, %s143
      %s160 = sphi 0, %s144
      %s168 = sphi 0, %s170
      %s171 = sphi 0, %s168
      %s172 = sphi 0, %s171
      %s188 = sphi 0, %s172
    $region4: #{tpu_custom_call.1} parent=1 // loop_header_branch
      %21 = sbr.rel (%p19) target = $region8
    $region5: #{tpu_custom_call.1} parent=1 // loop_body
      %s23 = ssub.s32 %s18, 1
      %s24 = ssub.s32 %s18, 2
      %s31 = sadd.s32 1, %s26
      %p32 = scmp.ge.s32.totalorder %s31, 1
      %s33 = scalar_select %p32, 0, %s31
      %s34 = sadd.s32 1, %s25
      %s35 = scalar_select %p32, %s34, %s25
      %p36 = scmp.ge.s32.totalorder %s35, 2
      %s37 = scalar_select %p36, 0, %s35
      %s38 = ssub.s32 %s25, %s37
      %s39 = ssub.s32 %s26, %s33
      %s40 = sor.u32 %s38, %s39
      %p41 = scmp.eq.s32.totalorder %s40, 0
      %s43 = sadd.s32 %s42, 1
      %s44 = scalar_select %p41, %s42, %s43
      %p47 = pneg %p41
      %p48 = scmp.eq.s32.totalorder %s18, 1
      %p49 = por %p47, %p48
      %p50 = scmp.ne.s32.totalorder %s42, %s45
      %p51 = scmp.eq.s32.totalorder %s18, 0
      %p52 = por %p50, %p51
      %p53 = scmp.ne.s32.totalorder %s42, %s45
      %p54 = scmp.eq.s32.totalorder %s23, 1
      %p55 = por %p53, %p54
      %p56 = scmp.ne.s32.totalorder %s45, %s46
      %p57 = scmp.eq.s32.totalorder %s23, 0
      %p58 = por %p56, %p57
      %p59 = scmp.ne.s32.totalorder %s45, %s46
      %p60 = scmp.eq.s32.totalorder %s24, 1
      %p61 = por %p59, %p60
      %p63 = scmp.ne.s32.totalorder %s46, %s62
      %p64 = scmp.eq.s32.totalorder %s24, 0
      %p65 = por %p63, %p64
      %s67 = sadd.s32 %s66, 1
      %p70 = scmp.eq.s32.totalorder %s18, 1
      %p71 = scmp.ne.s32.totalorder %s66, %s68
      %p72 = scmp.eq.s32.totalorder %s18, 0
      %p73 = por %p71, %p72
      %p74 = scmp.ne.s32.totalorder %s66, %s68
      %p75 = scmp.eq.s32.totalorder %s23, 1
      %p76 = por %p74, %p75
      %p77 = scmp.ne.s32.totalorder %s68, %s69
      %p78 = scmp.eq.s32.totalorder %s23, 0
      %p79 = por %p77, %p78
      %p80 = scmp.ne.s32.totalorder %s68, %s69
      %p81 = scmp.eq.s32.totalorder %s24, 1
      %p82 = por %p80, %p81
      %p84 = scmp.ne.s32.totalorder %s69, %s83
      %p85 = scmp.eq.s32.totalorder %s24, 0
      %p86 = por %p84, %p85
      %s88 = sadd.s32 %s87, 1
      %p91 = scmp.eq.s32.totalorder %s18, 1
      %p92 = scmp.ne.s32.totalorder %s87, %s89
      %p93 = scmp.eq.s32.totalorder %s18, 0
      %p94 = por %p92, %p93
      %p95 = scmp.ne.s32.totalorder %s87, %s89
      %p96 = scmp.eq.s32.totalorder %s23, 1
      %p97 = por %p95, %p96
      %p98 = scmp.ne.s32.totalorder %s89, %s90
      %p99 = scmp.eq.s32.totalorder %s23, 0
      %p100 = por %p98, %p99
      %p101 = scmp.ne.s32.totalorder %s89, %s90
      %p102 = scmp.eq.s32.totalorder %s24, 1
      %p103 = por %p101, %p102
      %p105 = scmp.ne.s32.totalorder %s90, %s104
      %p106 = scmp.eq.s32.totalorder %s24, 0
      %p107 = por %p105, %p106
      %s108 = ssub.s32 %s25, %s37
      %s109 = ssub.s32 %s26, %s33
      %s110 = sor.u32 %s108, %s109
      %p111 = scmp.eq.s32.totalorder %s110, 0
      %s113 = sadd.s32 %s112, 1
      %s114 = scalar_select %p111, %s112, %s113
      %p117 = pneg %p111
      %p118 = scmp.eq.s32.totalorder %s18, 1
      %p119 = por %p117, %p118
      %p120 = scmp.ne.s32.totalorder %s112, %s115
      %p121 = scmp.eq.s32.totalorder %s18, 0
      %p122 = por %p120, %p121
      %p123 = scmp.ne.s32.totalorder %s112, %s115
      %p124 = scmp.eq.s32.totalorder %s23, 1
      %p125 = por %p123, %p124
      %p126 = scmp.ne.s32.totalorder %s115, %s116
      %p127 = scmp.eq.s32.totalorder %s23, 0
      %p128 = por %p126, %p127
      %p129 = scmp.ne.s32.totalorder %s115, %s116
      %p130 = scmp.eq.s32.totalorder %s24, 1
      %p131 = por %p129, %p130
      %p133 = scmp.ne.s32.totalorder %s116, %s132
      %p134 = scmp.eq.s32.totalorder %s24, 0
      %p135 = por %p133, %p134
      %s136 = ssub.s32 %s25, %s37
      %s137 = ssub.s32 %s26, %s33
      %s138 = sor.u32 %s136, %s137
      %p139 = scmp.eq.s32.totalorder %s138, 0
      %s141 = sadd.s32 %s140, 1
      %s142 = scalar_select %p139, %s140, %s141
      %p145 = pneg %p139
      %p146 = scmp.eq.s32.totalorder %s18, 1
      %p147 = por %p145, %p146
      %p148 = scmp.ne.s32.totalorder %s140, %s143
      %p149 = scmp.eq.s32.totalorder %s18, 0
      %p150 = por %p148, %p149
      %p151 = scmp.ne.s32.totalorder %s140, %s143
      %p152 = scmp.eq.s32.totalorder %s23, 1
      %p153 = por %p151, %p152
      %p154 = scmp.ne.s32.totalorder %s143, %s144
      %p155 = scmp.eq.s32.totalorder %s23, 0
      %p156 = por %p154, %p155
      %p157 = scmp.ne.s32.totalorder %s143, %s144
      %p158 = scmp.eq.s32.totalorder %s24, 1
      %p159 = por %p157, %p158
      %p161 = scmp.ne.s32.totalorder %s144, %s160
      %p162 = scmp.eq.s32.totalorder %s24, 0
      %p163 = por %p161, %p162
      %s164 = ssub.s32 %s25, %s37
      %s165 = ssub.s32 %s26, %s33
      %s166 = sor.u32 %s164, %s165
      %p167 = scmp.eq.s32.totalorder %s166, 0
      %s169 = sadd.s32 %s168, 1
      %s170 = scalar_select %p167, %s168, %s169
      %p173 = pneg %p167
      %p174 = scmp.eq.s32.totalorder %s18, 1
      %p175 = por %p173, %p174
      %p176 = scmp.ne.s32.totalorder %s168, %s171
      %p177 = scmp.eq.s32.totalorder %s18, 0
      %p178 = por %p176, %p177
      %p179 = scmp.ne.s32.totalorder %s168, %s171
      %p180 = scmp.eq.s32.totalorder %s23, 1
      %p181 = por %p179, %p180
      %p182 = scmp.ne.s32.totalorder %s171, %s172
      %p183 = scmp.eq.s32.totalorder %s23, 0
      %p184 = por %p182, %p183
      %p185 = scmp.ne.s32.totalorder %s171, %s172
      %p186 = scmp.eq.s32.totalorder %s24, 1
      %p187 = por %p185, %p186
      %p189 = scmp.ne.s32.totalorder %s172, %s188
      %p190 = scmp.eq.s32.totalorder %s24, 0
      %p191 = por %p189, %p190
      %p192 = scmp.le.s32.totalorder 1, %s18
      %p193 = scmp.lt.s32.totalorder %s18, 3
      %p194 = pnand %p192, %p193
      %p195 = pneg %p194
      // Predicated region
      $region9: #{tpu_custom_call.1} parent=5 // pred_check
        _
      $region10: #{tpu_custom_call.1} parent=5 // pred_check_branch
        %197 = sbr.rel (%p194) target = $region12
      $region11: #{tpu_custom_call.1} parent=5 // pred_region
        %s198 = ssub.s32 %s18, 1
        // Predicated region
        $region13: #{tpu_custom_call.1} parent=11 // pred_check
          %p199 = pneg %p79
        $region14: #{tpu_custom_call.1} parent=11 // pred_check_branch
          %201 = sbr.rel (%p199) target = $region16
        $region15: #{tpu_custom_call.1} parent=11 // pred_region
          _
        $region16: #{tpu_custom_call.1} parent=11 // pred_fallthru
          _
        // Predicated region
        $region17: #{tpu_custom_call.1} parent=11 // pred_check
          %p202 = pneg %p100
        $region18: #{tpu_custom_call.1} parent=11 // pred_check_branch
          %204 = sbr.rel (%p202) target = $region20
        $region19: #{tpu_custom_call.1} parent=11 // pred_region
          _
        $region20: #{tpu_custom_call.1} parent=11 // pred_fallthru
          _
      $region12: #{tpu_custom_call.1} parent=5 // pred_fallthru
        _
      %p205 = scmp.lt.s32.totalorder %s18, 2
      // Predicated region
      $region21: #{tpu_custom_call.1} parent=5 // pred_check
        %p206 = pneg %p205
      $region22: #{tpu_custom_call.1} parent=5 // pred_check_branch
        %208 = sbr.rel (%p206) target = $region24
      $region23: #{tpu_custom_call.1} parent=5 // pred_region
        // Predicated region
        $region25: #{tpu_custom_call.1} parent=23 // pred_check
          %p209 = pneg %p52
        $region26: #{tpu_custom_call.1} parent=23 // pred_check_branch
          %211 = sbr.rel (%p209) target = $region28
        $region27: #{tpu_custom_call.1} parent=23 // pred_region
          %p212 = scmp.lt.s32.totalorder %s25, 1
          %s213 = scalar_select %p212, %s25, 1
          %p214 = scmp.lt.s32.totalorder %s26, 0
          %s215 = scalar_select %p214, %s26, 0
          %s216 = sadd.s32 %s215, %s213
          %s217 = smul.addr %s216, 8
          %s218 = scalar_lea.vmem %s0, %s217
        $region28: #{tpu_custom_call.1} parent=23 // pred_fallthru
          _
      $region24: #{tpu_custom_call.1} parent=5 // pred_fallthru
        _
      %p219 = scmp.le.s32.totalorder 1, %s18
      %p220 = scmp.lt.s32.totalorder %s18, 3
      %p221 = pnand %p219, %p220
      %p222 = pneg %p221
      // Predicated region
      $region29: #{tpu_custom_call.1} parent=5 // pred_check
        _
      $region30: #{tpu_custom_call.1} parent=5 // pred_check_branch
        %224 = sbr.rel (%p221) target = $region32
      $region31: #{tpu_custom_call.1} parent=5 // pred_region
        %s225 = ssub.s32 %s18, 1
        %p226 = scmp.lt.s32.totalorder %s27, 1
        %s227 = scalar_select %p226, %s27, 1
        %p228 = scmp.lt.s32.totalorder %s28, 0
        %s229 = scalar_select %p228, %s28, 0
        %s230 = sadd.s32 %s229, %s227
        %s231 = smul.addr %s230, 8
        %s232 = scalar_lea.vmem %s0, %s231
        %p233 = pneg %p58
        %p234 = pneg %p55
        %p235 = pneg %p79
        %p236 = pneg %p76
        %p237 = pneg %p100
        %p238 = pneg %p97
        %p239 = pneg %p128
        %p240 = pneg %p125
        %s241 = sand.u32 %s115, 1
        %s242 = scalar_lea.sflag [#allocation3], %s241
        %s243 = sand.u32 %s115, 1
        %s244 = smul.addr %s243, 16
        %s245 = scalar_lea.vmem [#allocation2], %s244
        %p246 = pneg %p156
        %p247 = pneg %p153
        %s248 = sand.u32 %s23, 1
        %s249 = scalar_lea.sflag [#allocation5], %s248
        %s250 = sand.u32 %s143, 1
        %s251 = smul.addr %s250, 16
        %s252 = scalar_lea.vmem [#allocation4], %s251
        %p253 = pneg %p184
        %p254 = pneg %p181
        %s255 = sand.u32 %s23, 1
        %s256 = scalar_lea.sflag [#allocation5], %s255
        %s257 = sand.u32 %s171, 1
        %s258 = smul.addr %s257, 16
        %s259 = scalar_lea.vmem [#allocation6], %s258
        %p260 = scmp.lt.s32.totalorder %s27, 1
        %s261 = scalar_select %p260, %s27, 1
        %p262 = scmp.lt.s32.totalorder %s28, 0
        %s263 = scalar_select %p262, %s28, 0
        %s264 = sadd.s32 %s263, %s261
        %s265 = smul.addr %s264, 8
        %s266 = scalar_lea.vmem %s0, %s265
        %v268 = vld [vmem:[%s266] sm:$0xff]
        %269 = vxpose.xlu0.b32.start [1/16] %v268, 128
        %270 = vxpose.xlu0.b32.cont [2/16] 0.0, 128
        %271 = vxpose.xlu0.b32.cont [3/16] 0.0, 128
        %272 = vxpose.xlu0.b32.cont [4/16] 0.0, 128
        %273 = vxpose.xlu0.b32.cont [5/16] 0.0, 128
        %274 = vxpose.xlu0.b32.cont [6/16] 0.0, 128
        %275 = vxpose.xlu0.b32.cont [7/16] 0.0, 128
        %276 = vxpose.xlu0.b32.cont [8/16] 0.0, 128
        %277 = vxpose.xlu0.b32.cont [9/16] 0.0, 128
        %278 = vxpose.xlu0.b32.cont [10/16] 0.0, 128
        %279 = vxpose.xlu0.b32.cont [11/16] 0.0, 128
        %280 = vxpose.xlu0.b32.cont [12/16] 0.0, 128
        %281 = vxpose.xlu0.b32.cont [13/16] 0.0, 128
        %282 = vxpose.xlu0.b32.cont [14/16] 0.0, 128
        %283 = vxpose.xlu0.b32.cont [15/16] 0.0, 128
        %284 = vxpose.xlu0.b32.end [16/16] 0.0, 128
        %v285 = vpop.trf.xlu0
        %v286 = vpop.trf.xlu0
        %v287 = vpop.trf.xlu0
        %v288 = vpop.trf.xlu0
        %v289 = vpop.trf.xlu0
        %v290 = vpop.trf.xlu0
        %v291 = vpop.trf.xlu0
        %v292 = vpop.trf.xlu0
        %v293 = vpop.trf.xlu0
        %v294 = vpop.trf.xlu0
        %v295 = vpop.trf.xlu0
        %v296 = vpop.trf.xlu0
        %v297 = vpop.trf.xlu0
        %v298 = vpop.trf.xlu0
        %v299 = vpop.trf.xlu0
        %v300 = vpop.trf.xlu0
        %v301 = vpack.c.bf16 %v286, %v285
        %v302 = vpack.c.bf16 %v288, %v287
        %v303 = vld [vmem:[%s1] sm:$0xf]
        %v304 = vld [vmem:[%s1 + $0x4] sm:$0xf]
        %v305 = vld [vmem:[%s1 + $0x8] sm:$0xf]
        %v306 = vld [vmem:[%s1 + $0xc] sm:$0xf]
        %v307 = vld [vmem:[%s1 + $0x10] sm:$0xf]
        %v308 = vld [vmem:[%s1 + $0x14] sm:$0xf]
        %v309 = vld [vmem:[%s1 + $0x18] sm:$0xf]
        %v310 = vld [vmem:[%s1 + $0x1c] sm:$0xf]
        %v311 = vld [vmem:[%s1 + $0x20] sm:$0xf]
        %v312 = vld [vmem:[%s1 + $0x24] sm:$0xf]
        %v313 = vld [vmem:[%s1 + $0x28] sm:$0xf]
        %v314 = vld [vmem:[%s1 + $0x2c] sm:$0xf]
        %v315 = vld [vmem:[%s2] sm:$0xff]
        %v316 = vld [vmem:[%s2 + $0x8] sm:$0xff]
        %v317 = vld [vmem:[%s2 + $0x10] sm:$0xff]
        %v318 = vld [vmem:[%s2 + $0x18] sm:$0xff]
        %v319 = vld [vmem:[%s2 + $0x20] sm:$0xff]
        %v320 = vld [vmem:[%s2 + $0x28] sm:$0xff]
        %v321 = vld [vmem:[%s2 + $0x30] sm:$0xff]
        %v322 = vld [vmem:[%s2 + $0x38] sm:$0xff]
        %v323 = vld [vmem:[%s2 + $0x40] sm:$0xff]
        %v324 = vld [vmem:[%s2 + $0x48] sm:$0xff]
        %v325 = vld [vmem:[%s2 + $0x50] sm:$0xff]
        %v326 = vld [vmem:[%s2 + $0x58] sm:$0xff]
        %328 = vset.pattern.permute.xlu0 0
        %329 = vperm.xlu0 %328, %v315
        %v330 = vpop.permute.xlu0 %329
        %333 = vset.pattern.permute.xlu0 0
        %334 = vperm.xlu0 %333, %v316
        %v335 = vpop.permute.xlu0 %334
        %338 = vset.pattern.permute.xlu0 0
        %339 = vperm.xlu0 %338, %v317
        %v340 = vpop.permute.xlu0 %339
        %343 = vset.pattern.permute.xlu0 0
        %344 = vperm.xlu0 %343, %v318
        %v345 = vpop.permute.xlu0 %344
        %348 = vset.pattern.permute.xlu0 0
        %349 = vperm.xlu0 %348, %v319
        %v350 = vpop.permute.xlu0 %349
        %353 = vset.pattern.permute.xlu0 0
        %354 = vperm.xlu0 %353, %v320
        %v355 = vpop.permute.xlu0 %354
        %358 = vset.pattern.permute.xlu0 0
        %359 = vperm.xlu0 %358, %v321
        %v360 = vpop.permute.xlu0 %359
        %363 = vset.pattern.permute.xlu0 0
        %364 = vperm.xlu0 %363, %v322
        %v365 = vpop.permute.xlu0 %364
        %368 = vset.pattern.permute.xlu0 0
        %369 = vperm.xlu0 %368, %v323
        %v370 = vpop.permute.xlu0 %369
        %373 = vset.pattern.permute.xlu0 0
        %374 = vperm.xlu0 %373, %v324
        %v375 = vpop.permute.xlu0 %374
        %378 = vset.pattern.permute.xlu0 0
        %379 = vperm.xlu0 %378, %v325
        %v380 = vpop.permute.xlu0 %379
        %383 = vset.pattern.permute.xlu0 0
        %384 = vperm.xlu0 %383, %v326
        %v385 = vpop.permute.xlu0 %384
        %v399 = vunpack.c.l.b16 %v303
        %v400 = vunpack.c.l.b16 %v304
        %v401 = vunpack.c.l.b16 %v305
        %v402 = vunpack.c.l.b16 %v306
        %v403 = vunpack.c.l.b16 %v307
        %v404 = vunpack.c.l.b16 %v308
        %v405 = vunpack.c.l.b16 %v309
        %v406 = vunpack.c.l.b16 %v310
        %v407 = vunpack.c.l.b16 %v311
        %v408 = vunpack.c.l.b16 %v312
        %v409 = vunpack.c.l.b16 %v313
        %v410 = vunpack.c.l.b16 %v314
        %v411 = vpack.c.b16 %v400, %v399
        %v412 = vpack.c.b16 %v402, %v401
        %v413 = vpack.c.b16 %v404, %v403
        %v414 = vpack.c.b16 %v406, %v405
        %v415 = vpack.c.b16 %v408, %v407
        %v416 = vpack.c.b16 %v410, %v409
        %vm417 = vcmask 261120
        %v419 = vsel %vm417, %v411, 0
        %v422 = vsel %vm417, %v412, 0
        %v425 = vsel %vm417, %v413, 0
        %v428 = vsel %vm417, %v414, 0
        %v431 = vsel %vm417, %v415, 0
        %v434 = vsel %vm417, %v416, 0
        %436 = vmatprep.subr.bf16.mxu0 0
        %437 = vmatpush1.bf16.msra.mxu0 %v301
        %438 = vmatprep.subr.bf16.mxu0 0
        %439 = vmatpush1.bf16.msra.mxu0 %v302
        %440 = vmatprep.subr.bf16.mxu0 0
        %441 = vmatpush1.bf16.msra.mxu0 0
        %442 = vmatprep.subr.bf16.mxu0 0
        %443 = vmatpush1.bf16.msra.mxu0 0
        %444 = vmatprep.subr.bf16.mxu0 0
        %445 = vmatpush1.bf16.msra.mxu0 0
        %446 = vmatprep.subr.bf16.mxu0 0
        %447 = vmatpush1.bf16.msra.mxu0 0
        %448 = vmatprep.subr.bf16.mxu0 0
        %449 = vmatpush1.bf16.msra.mxu0 0
        %450 = vmatprep.subr.bf16.mxu0 0
        %451 = vmatpush1.bf16.msra.mxu0 0
        %452 = vmatprep.subr.bf16.mxu0 0
        %453 = vmatpush1.bf16.msra.mxu0 0
        %454 = vmatprep.subr.bf16.mxu0 0
        %455 = vmatpush1.bf16.msra.mxu0 0
        %456 = vmatprep.subr.bf16.mxu0 0
        %457 = vmatpush1.bf16.msra.mxu0 0
        %458 = vmatprep.subr.bf16.mxu0 0
        %459 = vmatpush1.bf16.msra.mxu0 0
        %460 = vmatprep.subr.bf16.mxu0 0
        %461 = vmatpush1.bf16.msra.mxu0 0
        %462 = vmatprep.subr.bf16.mxu0 0
        %463 = vmatpush1.bf16.msra.mxu0 0
        %464 = vmatprep.subr.bf16.mxu0 0
        %465 = vmatpush1.bf16.msra.mxu0 0
        %466 = vmatprep.subr.bf16.mxu0 0
        %467 = vmatpush1.bf16.msra.mxu0 0
        %468 = vmatprep.mubr.bf16.mxu0 0
        %469 = vmatmul.mubr.bf16.gmra.mrb[0].mxu0 %v419
        %v470 = vpop.f32.mrb[0].mxu0
        %v471 = vadd.f32 %v330, %v470
        %v472 = vpop.f32.mrb[0].mxu0
        %v473 = vpop.f32.mrb[0].mxu0
        %v474 = vadd.f32 %v335, %v473
        %v475 = vpop.f32.mrb[0].mxu0
        %476 = vmatprep.mubr.bf16.mxu0 0
        %477 = vmatmul.mubr.bf16.gmra.mrb[0].mxu0 %v422
        %v478 = vpop.f32.mrb[0].mxu0
        %v479 = vadd.f32 %v340, %v478
        %v480 = vpop.f32.mrb[0].mxu0
        %v481 = vpop.f32.mrb[0].mxu0
        %v482 = vadd.f32 %v345, %v481
        %v483 = vpop.f32.mrb[0].mxu0
        %484 = vmatprep.mubr.bf16.mxu0 0
        %485 = vmatmul.mubr.bf16.gmra.mrb[0].mxu0 %v425
        %v486 = vpop.f32.mrb[0].mxu0
        %v487 = vadd.f32 %v350, %v486
        %v488 = vpop.f32.mrb[0].mxu0
        %v489 = vpop.f32.mrb[0].mxu0
        %v490 = vadd.f32 %v355, %v489
        %v491 = vpop.f32.mrb[0].mxu0
        %492 = vmatprep.mubr.bf16.mxu0 0
        %493 = vmatmul.mubr.bf16.gmra.mrb[0].mxu0 %v428
        %v494 = vpop.f32.mrb[0].mxu0
        %v495 = vadd.f32 %v360, %v494
        %v496 = vpop.f32.mrb[0].mxu0
        %v497 = vpop.f32.mrb[0].mxu0
        %v498 = vadd.f32 %v365, %v497
        %v499 = vpop.f32.mrb[0].mxu0
        %500 = vmatprep.mubr.bf16.mxu0 0
        %501 = vmatmul.mubr.bf16.gmra.mrb[0].mxu0 %v431
        %v502 = vpop.f32.mrb[0].mxu0
        %v503 = vadd.f32 %v370, %v502
        %v504 = vpop.f32.mrb[0].mxu0
        %v505 = vpop.f32.mrb[0].mxu0
        %v506 = vadd.f32 %v375, %v505
        %v507 = vpop.f32.mrb[0].mxu0
        %508 = vmatprep.mubr.bf16.mxu0 0
        %509 = vmatmul.mubr.bf16.gmra.mrb[0].mxu0 %v434
        %v510 = vpop.f32.mrb[0].mxu0
        %v511 = vadd.f32 %v380, %v510
        %v512 = vpop.f32.mrb[0].mxu0
        %v513 = vpop.f32.mrb[0].mxu0
        %v514 = vadd.f32 %v385, %v513
        %v515 = vpop.f32.mrb[0].mxu0
        %516 = vdwg.mxu0
        %517 = vxpose.xlu0.b32.start [1/16] %v471, 128
        %518 = vxpose.xlu0.b32.cont [2/16] 0.0, 128
        %519 = vxpose.xlu0.b32.cont [3/16] 0.0, 128
        %520 = vxpose.xlu0.b32.cont [4/16] 0.0, 128
        %521 = vxpose.xlu0.b32.cont [5/16] 0.0, 128
        %522 = vxpose.xlu0.b32.cont [6/16] 0.0, 128
        %523 = vxpose.xlu0.b32.cont [7/16] 0.0, 128
        %524 = vxpose.xlu0.b32.cont [8/16] 0.0, 128
        %525 = vxpose.xlu0.b32.cont [9/16] 0.0, 128
        %526 = vxpose.xlu0.b32.cont [10/16] 0.0, 128
        %527 = vxpose.xlu0.b32.cont [11/16] 0.0, 128
        %528 = vxpose.xlu0.b32.cont [12/16] 0.0, 128
        %529 = vxpose.xlu0.b32.cont [13/16] 0.0, 128
        %530 = vxpose.xlu0.b32.cont [14/16] 0.0, 128
        %531 = vxpose.xlu0.b32.cont [15/16] 0.0, 128
        %532 = vxpose.xlu0.b32.end [16/16] 0.0, 128
        %v533 = vpop.trf.xlu0
        %v534 = vpop.trf.xlu0
        %v535 = vpop.trf.xlu0
        %v536 = vpop.trf.xlu0
        %v537 = vpop.trf.xlu0
        %v538 = vpop.trf.xlu0
        %v539 = vpop.trf.xlu0
        %v540 = vpop.trf.xlu0
        %v541 = vpop.trf.xlu0
        %v542 = vpop.trf.xlu0
        %v543 = vpop.trf.xlu0
        %v544 = vpop.trf.xlu0
        %v545 = vpop.trf.xlu0
        %v546 = vpop.trf.xlu0
        %v547 = vpop.trf.xlu0
        %v548 = vpop.trf.xlu0
        %549 = vxpose.xlu0.b32.start [1/16] %v474, 128
        %550 = vxpose.xlu0.b32.cont [2/16] 0.0, 128
        %551 = vxpose.xlu0.b32.cont [3/16] 0.0, 128
        %552 = vxpose.xlu0.b32.cont [4/16] 0.0, 128
        %553 = vxpose.xlu0.b32.cont [5/16] 0.0, 128
        %554 = vxpose.xlu0.b32.cont [6/16] 0.0, 128
        %555 = vxpose.xlu0.b32.cont [7/16] 0.0, 128
        %556 = vxpose.xlu0.b32.cont [8/16] 0.0, 128
        %557 = vxpose.xlu0.b32.cont [9/16] 0.0, 128
        %558 = vxpose.xlu0.b32.cont [10/16] 0.0, 128
        %559 = vxpose.xlu0.b32.cont [11/16] 0.0, 128
        %560 = vxpose.xlu0.b32.cont [12/16] 0.0, 128
        %561 = vxpose.xlu0.b32.cont [13/16] 0.0, 128
        %562 = vxpose.xlu0.b32.cont [14/16] 0.0, 128
        %563 = vxpose.xlu0.b32.cont [15/16] 0.0, 128
        %564 = vxpose.xlu0.b32.end [16/16] 0.0, 128
        %v565 = vpop.trf.xlu0
        %v566 = vpop.trf.xlu0
        %v567 = vpop.trf.xlu0
        %v568 = vpop.trf.xlu0
        %v569 = vpop.trf.xlu0
        %v570 = vpop.trf.xlu0
        %v571 = vpop.trf.xlu0
        %v572 = vpop.trf.xlu0
        %v573 = vpop.trf.xlu0
        %v574 = vpop.trf.xlu0
        %v575 = vpop.trf.xlu0
        %v576 = vpop.trf.xlu0
        %v577 = vpop.trf.xlu0
        %v578 = vpop.trf.xlu0
        %v579 = vpop.trf.xlu0
        %v580 = vpop.trf.xlu0
        %581 = vxpose.xlu0.b32.start [1/16] %v479, 128
        %582 = vxpose.xlu0.b32.cont [2/16] 0.0, 128
        %583 = vxpose.xlu0.b32.cont [3/16] 0.0, 128
        %584 = vxpose.xlu0.b32.cont [4/16] 0.0, 128
        %585 = vxpose.xlu0.b32.cont [5/16] 0.0, 128
        %586 = vxpose.xlu0.b32.cont [6/16] 0.0, 128
        %587 = vxpose.xlu0.b32.cont [7/16] 0.0, 128
        %588 = vxpose.xlu0.b32.cont [8/16] 0.0, 128
        %589 = vxpose.xlu0.b32.cont [9/16] 0.0, 128
        %590 = vxpose.xlu0.b32.cont [10/16] 0.0, 128
        %591 = vxpose.xlu0.b32.cont [11/16] 0.0, 128
        %592 = vxpose.xlu0.b32.cont [12/16] 0.0, 128
        %593 = vxpose.xlu0.b32.cont [13/16] 0.0, 128
        %594 = vxpose.xlu0.b32.cont [14/16] 0.0, 128
        %595 = vxpose.xlu0.b32.cont [15/16] 0.0, 128
        %596 = vxpose.xlu0.b32.end [16/16] 0.0, 128
        %v597 = vpop.trf.xlu0
        %v598 = vpop.trf.xlu0
        %v599 = vpop.trf.xlu0
        %v600 = vpop.trf.xlu0
        %v601 = vpop.trf.xlu0
        %v602 = vpop.trf.xlu0
        %v603 = vpop.trf.xlu0
        %v604 = vpop.trf.xlu0
        %v605 = vpop.trf.xlu0
        %v606 = vpop.trf.xlu0
        %v607 = vpop.trf.xlu0
        %v608 = vpop.trf.xlu0
        %v609 = vpop.trf.xlu0
        %v610 = vpop.trf.xlu0
        %v611 = vpop.trf.xlu0
        %v612 = vpop.trf.xlu0
        %613 = vxpose.xlu0.b32.start [1/16] %v482, 128
        %614 = vxpose.xlu0.b32.cont [2/16] 0.0, 128
        %615 = vxpose.xlu0.b32.cont [3/16] 0.0, 128
        %616 = vxpose.xlu0.b32.cont [4/16] 0.0, 128
        %617 = vxpose.xlu0.b32.cont [5/16] 0.0, 128
        %618 = vxpose.xlu0.b32.cont [6/16] 0.0, 128
        %619 = vxpose.xlu0.b32.cont [7/16] 0.0, 128
        %620 = vxpose.xlu0.b32.cont [8/16] 0.0, 128
        %621 = vxpose.xlu0.b32.cont [9/16] 0.0, 128
        %622 = vxpose.xlu0.b32.cont [10/16] 0.0, 128
        %623 = vxpose.xlu0.b32.cont [11/16] 0.0, 128
        %624 = vxpose.xlu0.b32.cont [12/16] 0.0, 128
        %625 = vxpose.xlu0.b32.cont [13/16] 0.0, 128
        %626 = vxpose.xlu0.b32.cont [14/16] 0.0, 128
        %627 = vxpose.xlu0.b32.cont [15/16] 0.0, 128
        %628 = vxpose.xlu0.b32.end [16/16] 0.0, 128
        %v629 = vpop.trf.xlu0
        %v630 = vpop.trf.xlu0
        %v631 = vpop.trf.xlu0
        %v632 = vpop.trf.xlu0
        %v633 = vpop.trf.xlu0
        %v634 = vpop.trf.xlu0
        %v635 = vpop.trf.xlu0
        %v636 = vpop.trf.xlu0
        %v637 = vpop.trf.xlu0
        %v638 = vpop.trf.xlu0
        %v639 = vpop.trf.xlu0
        %v640 = vpop.trf.xlu0
        %v641 = vpop.trf.xlu0
        %v642 = vpop.trf.xlu0
        %v643 = vpop.trf.xlu0
        %v644 = vpop.trf.xlu0
        %v645 = vpack.c.bf16 %v533, %v533
        %v646 = vpack.c.bf16 %v565, %v565
        %v647 = vpack.c.bf16 %v597, %v597
        %v648 = vpack.c.bf16 %v629, %v629
        %vm649 = vcmask 60416
        %650 = vst.msk [vmem:[%s245] sm:$0xf] %vm649, %v645
        %651 = vst.msk [vmem:[%s245 + $0x4] sm:$0xf] %vm649, %v646
        %652 = vst.msk [vmem:[%s245 + $0x8] sm:$0xf] %vm649, %v647
        %653 = vst.msk [vmem:[%s245 + $0xc] sm:$0xf] %vm649, %v648
        %v654 = vpack.c.bf16 %v487, %v487
        %v655 = vpack.c.bf16 %v490, %v490
        %v656 = vpack.c.bf16 %v495, %v495
        %v657 = vpack.c.bf16 %v498, %v498
        %658 = vst.msk [vmem:[%s252] sm:$0xf] %vm649, %v654
        %659 = vst.msk [vmem:[%s252 + $0x4] sm:$0xf] %vm649, %v655
        %660 = vst.msk [vmem:[%s252 + $0x8] sm:$0xf] %vm649, %v656
        %661 = vst.msk [vmem:[%s252 + $0xc] sm:$0xf] %vm649, %v657
        %662 = vxpose.xlu0.b32.start [1/16] %v503, 128
        %663 = vxpose.xlu0.b32.cont [2/16] 0.0, 128
        %664 = vxpose.xlu0.b32.cont [3/16] 0.0, 128
        %665 = vxpose.xlu0.b32.cont [4/16] 0.0, 128
        %666 = vxpose.xlu0.b32.cont [5/16] 0.0, 128
        %667 = vxpose.xlu0.b32.cont [6/16] 0.0, 128
        %668 = vxpose.xlu0.b32.cont [7/16] 0.0, 128
        %669 = vxpose.xlu0.b32.cont [8/16] 0.0, 128
        %670 = vxpose.xlu0.b32.cont [9/16] 0.0, 128
        %671 = vxpose.xlu0.b32.cont [10/16] 0.0, 128
        %672 = vxpose.xlu0.b32.cont [11/16] 0.0, 128
        %673 = vxpose.xlu0.b32.cont [12/16] 0.0, 128
        %674 = vxpose.xlu0.b32.cont [13/16] 0.0, 128
        %675 = vxpose.xlu0.b32.cont [14/16] 0.0, 128
        %676 = vxpose.xlu0.b32.cont [15/16] 0.0, 128
        %677 = vxpose.xlu0.b32.end [16/16] 0.0, 128
        %v678 = vpop.trf.xlu0
        %v679 = vpop.trf.xlu0
        %v680 = vpop.trf.xlu0
        %v681 = vpop.trf.xlu0
        %v682 = vpop.trf.xlu0
        %v683 = vpop.trf.xlu0
        %v684 = vpop.trf.xlu0
        %v685 = vpop.trf.xlu0
        %v686 = vpop.trf.xlu0
        %v687 = vpop.trf.xlu0
        %v688 = vpop.trf.xlu0
        %v689 = vpop.trf.xlu0
        %v690 = vpop.trf.xlu0
        %v691 = vpop.trf.xlu0
        %v692 = vpop.trf.xlu0
        %v693 = vpop.trf.xlu0
        %694 = vxpose.xlu0.b32.start [1/16] %v506, 128
        %695 = vxpose.xlu0.b32.cont [2/16] 0.0, 128
        %696 = vxpose.xlu0.b32.cont [3/16] 0.0, 128
        %697 = vxpose.xlu0.b32.cont [4/16] 0.0, 128
        %698 = vxpose.xlu0.b32.cont [5/16] 0.0, 128
        %699 = vxpose.xlu0.b32.cont [6/16] 0.0, 128
        %700 = vxpose.xlu0.b32.cont [7/16] 0.0, 128
        %701 = vxpose.xlu0.b32.cont [8/16] 0.0, 128
        %702 = vxpose.xlu0.b32.cont [9/16] 0.0, 128
        %703 = vxpose.xlu0.b32.cont [10/16] 0.0, 128
        %704 = vxpose.xlu0.b32.cont [11/16] 0.0, 128
        %705 = vxpose.xlu0.b32.cont [12/16] 0.0, 128
        %706 = vxpose.xlu0.b32.cont [13/16] 0.0, 128
        %707 = vxpose.xlu0.b32.cont [14/16] 0.0, 128
        %708 = vxpose.xlu0.b32.cont [15/16] 0.0, 128
        %709 = vxpose.xlu0.b32.end [16/16] 0.0, 128
        %v710 = vpop.trf.xlu0
        %v711 = vpop.trf.xlu0
        %v712 = vpop.trf.xlu0
        %v713 = vpop.trf.xlu0
        %v714 = vpop.trf.xlu0
        %v715 = vpop.trf.xlu0
        %v716 = vpop.trf.xlu0
        %v717 = vpop.trf.xlu0
        %v718 = vpop.trf.xlu0
        %v719 = vpop.trf.xlu0
        %v720 = vpop.trf.xlu0
        %v721 = vpop.trf.xlu0
        %v722 = vpop.trf.xlu0
        %v723 = vpop.trf.xlu0
        %v724 = vpop.trf.xlu0
        %v725 = vpop.trf.xlu0
        %726 = vxpose.xlu0.b32.start [1/16] %v511, 128
        %727 = vxpose.xlu0.b32.cont [2/16] 0.0, 128
        %728 = vxpose.xlu0.b32.cont [3/16] 0.0, 128
        %729 = vxpose.xlu0.b32.cont [4/16] 0.0, 128
        %730 = vxpose.xlu0.b32.cont [5/16] 0.0, 128
        %731 = vxpose.xlu0.b32.cont [6/16] 0.0, 128
        %732 = vxpose.xlu0.b32.cont [7/16] 0.0, 128
        %733 = vxpose.xlu0.b32.cont [8/16] 0.0, 128
        %734 = vxpose.xlu0.b32.cont [9/16] 0.0, 128
        %735 = vxpose.xlu0.b32.cont [10/16] 0.0, 128
        %736 = vxpose.xlu0.b32.cont [11/16] 0.0, 128
        %737 = vxpose.xlu0.b32.cont [12/16] 0.0, 128
        %738 = vxpose.xlu0.b32.cont [13/16] 0.0, 128
        %739 = vxpose.xlu0.b32.cont [14/16] 0.0, 128
        %740 = vxpose.xlu0.b32.cont [15/16] 0.0, 128
        %741 = vxpose.xlu0.b32.end [16/16] 0.0, 128
        %v742 = vpop.trf.xlu0
        %v743 = vpop.trf.xlu0
        %v744 = vpop.trf.xlu0
        %v745 = vpop.trf.xlu0
        %v746 = vpop.trf.xlu0
        %v747 = vpop.trf.xlu0
        %v748 = vpop.trf.xlu0
        %v749 = vpop.trf.xlu0
        %v750 = vpop.trf.xlu0
        %v751 = vpop.trf.xlu0
        %v752 = vpop.trf.xlu0
        %v753 = vpop.trf.xlu0
        %v754 = vpop.trf.xlu0
        %v755 = vpop.trf.xlu0
        %v756 = vpop.trf.xlu0
        %v757 = vpop.trf.xlu0
        %758 = vxpose.xlu0.b32.start [1/16] %v514, 128
        %759 = vxpose.xlu0.b32.cont [2/16] 0.0, 128
        %760 = vxpose.xlu0.b32.cont [3/16] 0.0, 128
        %761 = vxpose.xlu0.b32.cont [4/16] 0.0, 128
        %762 = vxpose.xlu0.b32.cont [5/16] 0.0, 128
        %763 = vxpose.xlu0.b32.cont [6/16] 0.0, 128
        %764 = vxpose.xlu0.b32.cont [7/16] 0.0, 128
        %765 = vxpose.xlu0.b32.cont [8/16] 0.0, 128
        %766 = vxpose.xlu0.b32.cont [9/16] 0.0, 128
        %767 = vxpose.xlu0.b32.cont [10/16] 0.0, 128
        %768 = vxpose.xlu0.b32.cont [11/16] 0.0, 128
        %769 = vxpose.xlu0.b32.cont [12/16] 0.0, 128
        %770 = vxpose.xlu0.b32.cont [13/16] 0.0, 128
        %771 = vxpose.xlu0.b32.cont [14/16] 0.0, 128
        %772 = vxpose.xlu0.b32.cont [15/16] 0.0, 128
        %773 = vxpose.xlu0.b32.end [16/16] 0.0, 128
        %v774 = vpop.trf.xlu0
        %v775 = vpop.trf.xlu0
        %v776 = vpop.trf.xlu0
        %v777 = vpop.trf.xlu0
        %v778 = vpop.trf.xlu0
        %v779 = vpop.trf.xlu0
        %v780 = vpop.trf.xlu0
        %v781 = vpop.trf.xlu0
        %v782 = vpop.trf.xlu0
        %v783 = vpop.trf.xlu0
        %v784 = vpop.trf.xlu0
        %v785 = vpop.trf.xlu0
        %v786 = vpop.trf.xlu0
        %v787 = vpop.trf.xlu0
        %v788 = vpop.trf.xlu0
        %v789 = vpop.trf.xlu0
        %v790 = vpack.c.bf16 %v678, %v678
        %v791 = vpack.c.bf16 %v710, %v710
        %v792 = vpack.c.bf16 %v742, %v742
        %v793 = vpack.c.bf16 %v774, %v774
        %794 = vst.msk [vmem:[%s259] sm:$0xf] %vm649, %v790
        %795 = vst.msk [vmem:[%s259 + $0x4] sm:$0xf] %vm649, %v791
        %796 = vst.msk [vmem:[%s259 + $0x8] sm:$0xf] %vm649, %v792
        %797 = vst.msk [vmem:[%s259 + $0xc] sm:$0xf] %vm649, %v793
        %s798 = sand.u32 %s115, 1
        %s799 = scalar_lea.sflag [#allocation3], %s798
        %s800 = sand.u32 %s115, 1
        %s801 = smul.addr %s800, 16
        %s802 = scalar_lea.vmem [#allocation2], %s801
        %s803 = sand.u32 %s23, 1
        %s804 = scalar_lea.sflag [#allocation5], %s803
        %s805 = sand.u32 %s143, 1
        %s806 = smul.addr %s805, 16
        %s807 = scalar_lea.vmem [#allocation4], %s806
        %s808 = sand.u32 %s23, 1
        %s809 = scalar_lea.sflag [#allocation5], %s808
        %s810 = sand.u32 %s171, 1
        %s811 = smul.addr %s810, 16
        %s812 = scalar_lea.vmem [#allocation6], %s811
        // Predicated region
        $region33: #{tpu_custom_call.1} parent=31 // pred_check
          %p813 = pneg %p125
        $region34: #{tpu_custom_call.1} parent=31 // pred_check_branch
          %815 = sbr.rel (%p813) target = $region36
        $region35: #{tpu_custom_call.1} parent=31 // pred_region
          %s817 = ssub.s32 256, 256
          %818 = vsyncadd %s799, %s817
          %s819 = smul.addr %s27, 4
          %s820 = sadd.s32 %s28, %s819
          %s821 = smul.addr %s820, 64
          %s822 = scalar_lea.hbm %s3, %s821
          %s823 = sshll.u32 %s802, 4
          %s824 = int_to_ptr.vmem [resolvable:$true] %s823
          %829 = dma.vmem_to_hbm [thread:$0]  %s824, 256, %s822, %s799, 64, 64, 4
        $region36: #{tpu_custom_call.1} parent=31 // pred_fallthru
          _
        // Predicated region
        $region37: #{tpu_custom_call.1} parent=31 // pred_check
          %p830 = pneg %p153
        $region38: #{tpu_custom_call.1} parent=31 // pred_check_branch
          %832 = sbr.rel (%p830) target = $region40
        $region39: #{tpu_custom_call.1} parent=31 // pred_region
          %s834 = ssub.s32 256, 256
          %835 = vsyncadd %s804, %s834
          %s836 = smul.addr %s27, 4
          %s837 = sadd.s32 %s28, %s836
          %s838 = smul.addr %s837, 64
          %s839 = scalar_lea.hbm %s4, %s838
          %s840 = sshll.u32 %s807, 4
          %s841 = int_to_ptr.vmem [resolvable:$true] %s840
          %846 = dma.vmem_to_hbm [thread:$0]  %s841, 256, %s839, %s804, 64, 64, 4
        $region40: #{tpu_custom_call.1} parent=31 // pred_fallthru
          _
        // Predicated region
        $region41: #{tpu_custom_call.1} parent=31 // pred_check
          %p847 = pneg %p181
        $region42: #{tpu_custom_call.1} parent=31 // pred_check_branch
          %849 = sbr.rel (%p847) target = $region44
        $region43: #{tpu_custom_call.1} parent=31 // pred_region
          %s851 = ssub.s32 256, 256
          %852 = vsyncadd %s809, %s851
          %s853 = smul.addr %s27, 4
          %s854 = sadd.s32 %s28, %s853
          %s855 = smul.addr %s854, 64
          %s856 = scalar_lea.hbm %s5, %s855
          %s857 = sshll.u32 %s812, 4
          %s858 = int_to_ptr.vmem [resolvable:$true] %s857
          %863 = dma.vmem_to_hbm [thread:$0]  %s858, 256, %s856, %s809, 64, 64, 4
        $region44: #{tpu_custom_call.1} parent=31 // pred_fallthru
          _
      $region32: #{tpu_custom_call.1} parent=5 // pred_fallthru
        _
      %p864 = scmp.le.s32.totalorder 2, %s18
      // Predicated region
      $region45: #{tpu_custom_call.1} parent=5 // pred_check
        %p865 = pneg %p864
      $region46: #{tpu_custom_call.1} parent=5 // pred_check_branch
        %867 = sbr.rel (%p865) target = $region48
      $region47: #{tpu_custom_call.1} parent=5 // pred_region
        %s868 = ssub.s32 %s18, 2
        // Predicated region
        $region49: #{tpu_custom_call.1} parent=47 // pred_check
          %p869 = pneg %p131
        $region50: #{tpu_custom_call.1} parent=47 // pred_check_branch
          %871 = sbr.rel (%p869) target = $region52
        $region51: #{tpu_custom_call.1} parent=47 // pred_region
          %s872 = sand.u32 %s116, 1
          %s873 = scalar_lea.sflag [#allocation3], %s872
          %s874 = sand.u32 %s116, 1
          %s875 = smul.addr %s874, 16
          %s876 = scalar_lea.vmem [#allocation2], %s875
          %877 = dma.done %s873, 256
        $region52: #{tpu_custom_call.1} parent=47 // pred_fallthru
          _
        // Predicated region
        $region53: #{tpu_custom_call.1} parent=47 // pred_check
          %p878 = pneg %p159
        $region54: #{tpu_custom_call.1} parent=47 // pred_check_branch
          %880 = sbr.rel (%p878) target = $region56
        $region55: #{tpu_custom_call.1} parent=47 // pred_region
          %s881 = sand.u32 %s24, 1
          %s882 = scalar_lea.sflag [#allocation5], %s881
          %s883 = sand.u32 %s144, 1
          %s884 = smul.addr %s883, 16
          %s885 = scalar_lea.vmem [#allocation4], %s884
          %886 = dma.done %s882, 256
        $region56: #{tpu_custom_call.1} parent=47 // pred_fallthru
          _
        // Predicated region
        $region57: #{tpu_custom_call.1} parent=47 // pred_check
          %p887 = pneg %p187
        $region58: #{tpu_custom_call.1} parent=47 // pred_check_branch
          %889 = sbr.rel (%p887) target = $region60
        $region59: #{tpu_custom_call.1} parent=47 // pred_region
          %s890 = sand.u32 %s24, 1
          %s891 = scalar_lea.sflag [#allocation5], %s890
          %s892 = sand.u32 %s172, 1
          %s893 = smul.addr %s892, 16
          %s894 = scalar_lea.vmem [#allocation6], %s893
          %895 = dma.done %s891, 256
        $region60: #{tpu_custom_call.1} parent=47 // pred_fallthru
          _
      $region48: #{tpu_custom_call.1} parent=5 // pred_fallthru
        _
    $region6: #{tpu_custom_call.1} parent=1 // loop_footer
      %s22 = sadd.s32 1, %s18
    $region7: #{tpu_custom_call.1} parent=1 // loop_footer_branch
      %17 = sbr.rel target = $region3
    $region8: #{tpu_custom_call.1} parent=1 // loop_exit
      _
    %896 = vsyncpa [#allocation3], 1
    %s897 = scalar_lea.sflag [#allocation3], 1
    %898 = vsyncpa %s897, 1
    %899 = vsyncpa [#allocation5], 1
    %s900 = scalar_lea.sflag [#allocation5], 1
    %901 = vsyncpa %s900, 1

// kernel: tpu_custom_call.1
$region0: #{tpu_custom_call.1}
  #allocation0 [shape = 'u32[]', space=smem, size = 0x4, offset = 0x4, fixed_abs, tag = 'smem constant byte address 0x4 - core index']
  #allocation1 [shape = 'u32[144,128]{1,0:T(1,128)}', space=vmem, size = 0x12000, scoped, tag = 'internal scratch']
  %s0 = inlined_call_operand.vmem [shape: f32[2,8,32], index: 0, kind: input, shape index: {}]
  %s1 = inlined_call_operand.vmem [shape: bf16[96,32], index: 1, kind: input, shape index: {}]
  %s2 = inlined_call_operand.vmem [shape: f32[96,1], index: 2, kind: input, shape index: {}]
  %s3 = inlined_call_operand.hbm [shape: bf16[2,4,8,8], index: 3, kind: output, shape index: {0}]
  %s4 = inlined_call_operand.hbm [shape: bf16[2,4,8,8], index: 4, kind: output, shape index: {1}]
  %s5 = inlined_call_operand.hbm [shape: bf16[2,4,8,8], index: 5, kind: output, shape index: {2}]
  %6 = xla_tuple %s3, %s4, %s5
  %s7 = sld [smem:[#allocation0]]
  $region61: #{tpu_custom_call.1} parent=0
    _
  %s9 = ssub.s32 1, %s7
  %s10 = scalar_select 0, %s9, %s7
  $region1: #{tpu_custom_call.1} parent=0
    #allocation2 [shape = 'u8[16384]{0}', space=vmem, size = 0x4000, scoped, tag = 'output window, operand 0']
    #allocation3 [shape = 's32[2]{0}', space=sflag, size = 0x8, scoped, tag = 'scoped memory for tpu_custom_call.1']
    #allocation4 [shape = 'u8[16384]{0}', space=vmem, size = 0x4000, scoped, tag = 'output window, operand 1']
    #allocation5 [shape = 's32[2]{0}', space=sflag, size = 0x8, scoped, tag = 'scoped memory for tpu_custom_call.1']
    #allocation6 [shape = 'u8[16384]{0}', space=vmem, size = 0x4000, scoped, tag = 'output window, operand 2']
    %11 = vsyncpa [#allocation3], 0
    %s12 = scalar_lea.sflag [#allocation3], 1
    %13 = vsyncpa %s12, 0
    %14 = vsyncpa [#allocation5], 0
    %s15 = scalar_lea.sflag [#allocation5], 1
    %16 = vsyncpa %s15, 0
    loop: start=0, step=1, limit=4
    $region2: #{tpu_custom_call.1} parent=1 // loop_pre_header
      _
    $region3: #{tpu_custom_call.1} parent=1 // loop_header
      %s18 = sphi 0, %s22
      %p19 = scmp.ge.s32.totalorder %s18, 4
      %s25 = sphi 0, %s37
      %s26 = sphi 0, %s33
      %s27 = sphi 0, %s25
      %s28 = sphi 0, %s26
      %s29 = sphi 0, %s27
      %s30 = sphi 0, %s28
      %s42 = sphi 0, %s44
      %s45 = sphi 0, %s42
      %s46 = sphi 0, %s45
      %s62 = sphi 0, %s46
      %s66 = sphi 0, %s66
      %s68 = sphi 0, %s66
      %s69 = sphi 0, %s68
      %s83 = sphi 0, %s69
      %s87 = sphi 0, %s87
      %s89 = sphi 0, %s87
      %s90 = sphi 0, %s89
      %s104 = sphi 0, %s90
      %s112 = sphi 0, %s114
      %s115 = sphi 0, %s112
      %s116 = sphi 0, %s115
      %s132 = sphi 0, %s116
      %s140 = sphi 0, %s142
      %s143 = sphi 0, %s140
      %s144 = sphi 0, %s143
      %s160 = sphi 0, %s144
      %s168 = sphi 0, %s170
      %s171 = sphi 0, %s168
      %s172 = sphi 0, %s171
      %s188 = sphi 0, %s172
    $region4: #{tpu_custom_call.1} parent=1 // loop_header_branch
      %21 = sbr.rel (%p19) target = $region8
    $region5: #{tpu_custom_call.1} parent=1 // loop_body
      %s23 = ssub.s32 %s18, 1
      %s24 = ssub.s32 %s18, 2
      %s31 = sadd.s32 1, %s26
      %p32 = scmp.ge.s32.totalorder %s31, 1
      %s33 = scalar_select %p32, 0, %s31
      %s34 = sadd.s32 1, %s25
      %s35 = scalar_select %p32, %s34, %s25
      %p36 = scmp.ge.s32.totalorder %s35, 2
      %s37 = scalar_select %p36, 0, %s35
      %s38 = ssub.s32 %s25, %s37
      %s39 = ssub.s32 %s26, %s33
      %s40 = sor.u32 %s38, %s39
      %p41 = scmp.eq.s32.totalorder %s40, 0
      %s43 = sadd.s32 %s42, 1
      %s44 = scalar_select %p41, %s42, %s43
      %p47 = pneg %p41
      %p48 = scmp.eq.s32.totalorder %s18, 1
      %p49 = por %p47, %p48
      %p50 = scmp.ne.s32.totalorder %s42, %s45
      %p51 = scmp.eq.s32.totalorder %s18, 0
      %p52 = por %p50, %p51
      %p53 = scmp.ne.s32.totalorder %s42, %s45
      %p54 = scmp.eq.s32.totalorder %s23, 1
      %p55 = por %p53, %p54
      %p56 = scmp.ne.s32.totalorder %s45, %s46
      %p57 = scmp.eq.s32.totalorder %s23, 0
      %p58 = por %p56, %p57
      %p59 = scmp.ne.s32.totalorder %s45, %s46
      %p60 = scmp.eq.s32.totalorder %s24, 1
      %p61 = por %p59, %p60
      %p63 = scmp.ne.s32.totalorder %s46, %s62
      %p64 = scmp.eq.s32.totalorder %s24, 0
      %p65 = por %p63, %p64
      %s67 = sadd.s32 %s66, 1
      %p70 = scmp.eq.s32.totalorder %s18, 1
      %p71 = scmp.ne.s32.totalorder %s66, %s68
      %p72 = scmp.eq.s32.totalorder %s18, 0
      %p73 = por %p71, %p72
      %p74 = scmp.ne.s32.totalorder %s66, %s68
      %p75 = scmp.eq.s32.totalorder %s23, 1
      %p76 = por %p74, %p75
      %p77 = scmp.ne.s32.totalorder %s68, %s69
      %p78 = scmp.eq.s32.totalorder %s23, 0
      %p79 = por %p77, %p78
      %p80 = scmp.ne.s32.totalorder %s68, %s69
      %p81 = scmp.eq.s32.totalorder %s24, 1
      %p82 = por %p80, %p81
      %p84 = scmp.ne.s32.totalorder %s69, %s83
      %p85 = scmp.eq.s32.totalorder %s24, 0
      %p86 = por %p84, %p85
      %s88 = sadd.s32 %s87, 1
      %p91 = scmp.eq.s32.totalorder %s18, 1
      %p92 = scmp.ne.s32.totalorder %s87, %s89
      %p93 = scmp.eq.s32.totalorder %s18, 0
      %p94 = por %p92, %p93
      %p95 = scmp.ne.s32.totalorder %s87, %s89
      %p96 = scmp.eq.s32.totalorder %s23, 1
      %p97 = por %p95, %p96
      %p98 = scmp.ne.s32.totalorder %s89, %s90
      %p99 = scmp.eq.s32.totalorder %s23, 0
      %p100 = por %p98, %p99
      %p101 = scmp.ne.s32.totalorder %s89, %s90
      %p102 = scmp.eq.s32.totalorder %s24, 1
      %p103 = por %p101, %p102
      %p105 = scmp.ne.s32.totalorder %s90, %s104
      %p106 = scmp.eq.s32.totalorder %s24, 0
      %p107 = por %p105, %p106
      %s108 = ssub.s32 %s25, %s37
      %s109 = ssub.s32 %s26, %s33
      %s110 = sor.u32 %s108, %s109
      %p111 = scmp.eq.s32.totalorder %s110, 0
      %s113 = sadd.s32 %s112, 1
      %s114 = scalar_select %p111, %s112, %s113
      %p117 = pneg %p111
      %p118 = scmp.eq.s32.totalorder %s18, 1
      %p119 = por %p117, %p118
      %p120 = scmp.ne.s32.totalorder %s112, %s115
      %p121 = scmp.eq.s32.totalorder %s18, 0
      %p122 = por %p120, %p121
      %p123 = scmp.ne.s32.totalorder %s112, %s115
      %p124 = scmp.eq.s32.totalorder %s23, 1
      %p125 = por %p123, %p124
      %p126 = scmp.ne.s32.totalorder %s115, %s116
      %p127 = scmp.eq.s32.totalorder %s23, 0
      %p128 = por %p126, %p127
      %p129 = scmp.ne.s32.totalorder %s115, %s116
      %p130 = scmp.eq.s32.totalorder %s24, 1
      %p131 = por %p129, %p130
      %p133 = scmp.ne.s32.totalorder %s116, %s132
      %p134 = scmp.eq.s32.totalorder %s24, 0
      %p135 = por %p133, %p134
      %s136 = ssub.s32 %s25, %s37
      %s137 = ssub.s32 %s26, %s33
      %s138 = sor.u32 %s136, %s137
      %p139 = scmp.eq.s32.totalorder %s138, 0
      %s141 = sadd.s32 %s140, 1
      %s142 = scalar_select %p139, %s140, %s141
      %p145 = pneg %p139
      %p146 = scmp.eq.s32.totalorder %s18, 1
      %p147 = por %p145, %p146
      %p148 = scmp.ne.s32.totalorder %s140, %s143
      %p149 = scmp.eq.s32.totalorder %s18, 0
      %p150 = por %p148, %p149
      %p151 = scmp.ne.s32.totalorder %s140, %s143
      %p152 = scmp.eq.s32.totalorder %s23, 1
      %p153 = por %p151, %p152
      %p154 = scmp.ne.s32.totalorder %s143, %s144
      %p155 = scmp.eq.s32.totalorder %s23, 0
      %p156 = por %p154, %p155
      %p157 = scmp.ne.s32.totalorder %s143, %s144
      %p158 = scmp.eq.s32.totalorder %s24, 1
      %p159 = por %p157, %p158
      %p161 = scmp.ne.s32.totalorder %s144, %s160
      %p162 = scmp.eq.s32.totalorder %s24, 0
      %p163 = por %p161, %p162
      %s164 = ssub.s32 %s25, %s37
      %s165 = ssub.s32 %s26, %s33
      %s166 = sor.u32 %s164, %s165
      %p167 = scmp.eq.s32.totalorder %s166, 0
      %s169 = sadd.s32 %s168, 1
      %s170 = scalar_select %p167, %s168, %s169
      %p173 = pneg %p167
      %p174 = scmp.eq.s32.totalorder %s18, 1
      %p175 = por %p173, %p174
      %p176 = scmp.ne.s32.totalorder %s168, %s171
      %p177 = scmp.eq.s32.totalorder %s18, 0
      %p178 = por %p176, %p177
      %p179 = scmp.ne.s32.totalorder %s168, %s171
      %p180 = scmp.eq.s32.totalorder %s23, 1
      %p181 = por %p179, %p180
      %p182 = scmp.ne.s32.totalorder %s171, %s172
      %p183 = scmp.eq.s32.totalorder %s23, 0
      %p184 = por %p182, %p183
      %p185 = scmp.ne.s32.totalorder %s171, %s172
      %p186 = scmp.eq.s32.totalorder %s24, 1
      %p187 = por %p185, %p186
      %p189 = scmp.ne.s32.totalorder %s172, %s188
      %p190 = scmp.eq.s32.totalorder %s24, 0
      %p191 = por %p189, %p190
      %p192 = scmp.le.s32.totalorder 1, %s18
      %p193 = scmp.lt.s32.totalorder %s18, 3
      %p194 = pnand %p192, %p193
      %p195 = pneg %p194
      // Predicated region
      $region9: #{tpu_custom_call.1} parent=5 // pred_check
        _
      $region10: #{tpu_custom_call.1} parent=5 // pred_check_branch
        %197 = sbr.rel (%p194) target = $region12
      $region11: #{tpu_custom_call.1} parent=5 // pred_region
        %s198 = ssub.s32 %s18, 1
        // Predicated region
        $region13: #{tpu_custom_call.1} parent=11 // pred_check
          %p199 = pneg %p79
        $region14: #{tpu_custom_call.1} parent=11 // pred_check_branch
          %201 = sbr.rel (%p199) target = $region16
        $region15: #{tpu_custom_call.1} parent=11 // pred_region
          _
        $region16: #{tpu_custom_call.1} parent=11 // pred_fallthru
          _
        // Predicated region
        $region17: #{tpu_custom_call.1} parent=11 // pred_check
          %p202 = pneg %p100
        $region18: #{tpu_custom_call.1} parent=11 // pred_check_branch
          %204 = sbr.rel (%p202) target = $region20
        $region19: #{tpu_custom_call.1} parent=11 // pred_region
          _
        $region20: #{tpu_custom_call.1} parent=11 // pred_fallthru
          _
      $region12: #{tpu_custom_call.1} parent=5 // pred_fallthru
        _
      %p205 = scmp.lt.s32.totalorder %s18, 2
      // Predicated region
      $region21: #{tpu_custom_call.1} parent=5 // pred_check
        %p206 = pneg %p205
      $region22: #{tpu_custom_call.1} parent=5 // pred_check_branch
        %208 = sbr.rel (%p206) target = $region24
      $region23: #{tpu_custom_call.1} parent=5 // pred_region
        // Predicated region
        $region25: #{tpu_custom_call.1} parent=23 // pred_check
          %p209 = pneg %p52
        $region26: #{tpu_custom_call.1} parent=23 // pred_check_branch
          %211 = sbr.rel (%p209) target = $region28
        $region27: #{tpu_custom_call.1} parent=23 // pred_region
          %p212 = scmp.lt.s32.totalorder %s25, 1
          %s213 = scalar_select %p212, %s25, 1
          %p214 = scmp.lt.s32.totalorder %s26, 0
          %s215 = scalar_select %p214, %s26, 0
          %s216 = sadd.s32 %s215, %s213
          %s217 = smul.addr %s216, 8
          %s218 = scalar_lea.vmem %s0, %s217
        $region28: #{tpu_custom_call.1} parent=23 // pred_fallthru
          _
      $region24: #{tpu_custom_call.1} parent=5 // pred_fallthru
        _
      %p219 = scmp.le.s32.totalorder 1, %s18
      %p220 = scmp.lt.s32.totalorder %s18, 3
      %p221 = pnand %p219, %p220
      %p222 = pneg %p221
      // Predicated region
      $region29: #{tpu_custom_call.1} parent=5 // pred_check
        _
      $region30: #{tpu_custom_call.1} parent=5 // pred_check_branch
        %224 = sbr.rel (%p221) target = $region32
      $region31: #{tpu_custom_call.1} parent=5 // pred_region
        %s225 = ssub.s32 %s18, 1
        %p226 = scmp.lt.s32.totalorder %s27, 1
        %s227 = scalar_select %p226, %s27, 1
        %p228 = scmp.lt.s32.totalorder %s28, 0
        %s229 = scalar_select %p228, %s28, 0
        %s230 = sadd.s32 %s229, %s227
        %s231 = smul.addr %s230, 8
        %s232 = scalar_lea.vmem %s0, %s231
        %p233 = pneg %p58
        %p234 = pneg %p55
        %p235 = pneg %p79
        %p236 = pneg %p76
        %p237 = pneg %p100
        %p238 = pneg %p97
        %p239 = pneg %p128
        %p240 = pneg %p125
        %s241 = sand.u32 %s115, 1
        %s242 = scalar_lea.sflag [#allocation3], %s241
        %s243 = sand.u32 %s115, 1
        %s244 = smul.addr %s243, 16
        %s245 = scalar_lea.vmem [#allocation2], %s244
        %p246 = pneg %p156
        %p247 = pneg %p153
        %s248 = sand.u32 %s23, 1
        %s249 = scalar_lea.sflag [#allocation5], %s248
        %s250 = sand.u32 %s143, 1
        %s251 = smul.addr %s250, 16
        %s252 = scalar_lea.vmem [#allocation4], %s251
        %p253 = pneg %p184
        %p254 = pneg %p181
        %s255 = sand.u32 %s23, 1
        %s256 = scalar_lea.sflag [#allocation5], %s255
        %s257 = sand.u32 %s171, 1
        %s258 = smul.addr %s257, 16
        %s259 = scalar_lea.vmem [#allocation6], %s258
        %p260 = scmp.lt.s32.totalorder %s27, 1
        %s261 = scalar_select %p260, %s27, 1
        %p262 = scmp.lt.s32.totalorder %s28, 0
        %s263 = scalar_select %p262, %s28, 0
        %s264 = sadd.s32 %s263, %s261
        %s265 = smul.addr %s264, 8
        %s266 = scalar_lea.vmem %s0, %s265
        %v268 = vld [vmem:[%s266] sm:$0xff]
        %269 = vxpose.xlu0.b32.start [1/16] %v268, 128
        %270 = vxpose.xlu0.b32.cont [2/16] 0.0, 128
        %271 = vxpose.xlu0.b32.cont [3/16] 0.0, 128
        %272 = vxpose.xlu0.b32.cont [4/16] 0.0, 128
        %273 = vxpose.xlu0.b32.cont [5/16] 0.0, 128
        %274 = vxpose.xlu0.b32.cont [6/16] 0.0, 128
        %275 = vxpose.xlu0.b32.cont [7/16] 0.0, 128
        %276 = vxpose.xlu0.b32.cont [8/16] 0.0, 128
        %277 = vxpose.xlu0.b32.cont [9/16] 0.0, 128
        %278 = vxpose.xlu0.b32.cont [10/16] 0.0, 128
        %279 = vxpose.xlu0.b32.cont [11/16] 0.0, 128
        %280 = vxpose.xlu0.b32.cont [12/16] 0.0, 128
        %281 = vxpose.xlu0.b32.cont [13/16] 0.0, 128
        %282 = vxpose.xlu0.b32.cont [14/16] 0.0, 128
        %283 = vxpose.xlu0.b32.cont [15/16] 0.0, 128
        %284 = vxpose.xlu0.b32.end [16/16] 0.0, 128
        %v285 = vpop.trf.xlu0
        %v286 = vpop.trf.xlu0
        %v287 = vpop.trf.xlu0
        %v288 = vpop.trf.xlu0
        %v289 = vpop.trf.xlu0
        %v290 = vpop.trf.xlu0
        %v291 = vpop.trf.xlu0
        %v292 = vpop.trf.xlu0
        %v293 = vpop.trf.xlu0
        %v294 = vpop.trf.xlu0
        %v295 = vpop.trf.xlu0
        %v296 = vpop.trf.xlu0
        %v297 = vpop.trf.xlu0
        %v298 = vpop.trf.xlu0
        %v299 = vpop.trf.xlu0
        %v300 = vpop.trf.xlu0
        %v301 = vpack.c.bf16 %v286, %v285
        %v302 = vpack.c.bf16 %v288, %v287
        %v303 = vld [vmem:[%s1] sm:$0xf]
        %v304 = vld [vmem:[%s1 + $0x4] sm:$0xf]
        %v305 = vld [vmem:[%s1 + $0x8] sm:$0xf]
        %v306 = vld [vmem:[%s1 + $0xc] sm:$0xf]
        %v307 = vld [vmem:[%s1 + $0x10] sm:$0xf]
        %v308 = vld [vmem:[%s1 + $0x14] sm:$0xf]
        %v309 = vld [vmem:[%s1 + $0x18] sm:$0xf]
        %v310 = vld [vmem:[%s1 + $0x1c] sm:$0xf]
        %v311 = vld [vmem:[%s1 + $0x20] sm:$0xf]
        %v312 = vld [vmem:[%s1 + $0x24] sm:$0xf]
        %v313 = vld [vmem:[%s1 + $0x28] sm:$0xf]
        %v314 = vld [vmem:[%s1 + $0x2c] sm:$0xf]
        %v315 = vld [vmem:[%s2] sm:$0xff]
        %v316 = vld [vmem:[%s2 + $0x8] sm:$0xff]
        %v317 = vld [vmem:[%s2 + $0x10] sm:$0xff]
        %v318 = vld [vmem:[%s2 + $0x18] sm:$0xff]
        %v319 = vld [vmem:[%s2 + $0x20] sm:$0xff]
        %v320 = vld [vmem:[%s2 + $0x28] sm:$0xff]
        %v321 = vld [vmem:[%s2 + $0x30] sm:$0xff]
        %v322 = vld [vmem:[%s2 + $0x38] sm:$0xff]
        %v323 = vld [vmem:[%s2 + $0x40] sm:$0xff]
        %v324 = vld [vmem:[%s2 + $0x48] sm:$0xff]
        %v325 = vld [vmem:[%s2 + $0x50] sm:$0xff]
        %v326 = vld [vmem:[%s2 + $0x58] sm:$0xff]
        %328 = vset.pattern.permute.xlu0 0
        %329 = vperm.xlu0 %328, %v315
        %v330 = vpop.permute.xlu0 %329
        %333 = vset.pattern.permute.xlu0 0
        %334 = vperm.xlu0 %333, %v316
        %v335 = vpop.permute.xlu0 %334
        %338 = vset.pattern.permute.xlu0 0
        %339 = vperm.xlu0 %338, %v317
        %v340 = vpop.permute.xlu0 %339
        %343 = vset.pattern.permute.xlu0 0
        %344 = vperm.xlu0 %343, %v318
        %v345 = vpop.permute.xlu0 %344
        %348 = vset.pattern.permute.xlu0 0
        %349 = vperm.xlu0 %348, %v319
        %v350 = vpop.permute.xlu0 %349
        %353 = vset.pattern.permute.xlu0 0
        %354 = vperm.xlu0 %353, %v320
        %v355 = vpop.permute.xlu0 %354
        %358 = vset.pattern.permute.xlu0 0
        %359 = vperm.xlu0 %358, %v321
        %v360 = vpop.permute.xlu0 %359
        %363 = vset.pattern.permute.xlu0 0
        %364 = vperm.xlu0 %363, %v322
        %v365 = vpop.permute.xlu0 %364
        %368 = vset.pattern.permute.xlu0 0
        %369 = vperm.xlu0 %368, %v323
        %v370 = vpop.permute.xlu0 %369
        %373 = vset.pattern.permute.xlu0 0
        %374 = vperm.xlu0 %373, %v324
        %v375 = vpop.permute.xlu0 %374
        %378 = vset.pattern.permute.xlu0 0
        %379 = vperm.xlu0 %378, %v325
        %v380 = vpop.permute.xlu0 %379
        %383 = vset.pattern.permute.xlu0 0
        %384 = vperm.xlu0 %383, %v326
        %v385 = vpop.permute.xlu0 %384
        %v399 = vunpack.c.l.b16 %v303
        %v400 = vunpack.c.l.b16 %v304
        %v401 = vunpack.c.l.b16 %v305
        %v402 = vunpack.c.l.b16 %v306
        %v403 = vunpack.c.l.b16 %v307
        %v404 = vunpack.c.l.b16 %v308
        %v405 = vunpack.c.l.b16 %v309
        %v406 = vunpack.c.l.b16 %v310
        %v407 = vunpack.c.l.b16 %v311
        %v408 = vunpack.c.l.b16 %v312
        %v409 = vunpack.c.l.b16 %v313
        %v410 = vunpack.c.l.b16 %v314
        %v411 = vpack.c.b16 %v400, %v399
        %v412 = vpack.c.b16 %v402, %v401
        %v413 = vpack.c.b16 %v404, %v403
        %v414 = vpack.c.b16 %v406, %v405
        %v415 = vpack.c.b16 %v408, %v407
        %v416 = vpack.c.b16 %v410, %v409
        %vm417 = vcmask 261120
        %v419 = vsel %vm417, %v411, 0
        %v422 = vsel %vm417, %v412, 0
        %v425 = vsel %vm417, %v413, 0
        %v428 = vsel %vm417, %v414, 0
        %v431 = vsel %vm417, %v415, 0
        %v434 = vsel %vm417, %v416, 0
        %436 = vmatprep.subr.bf16.mxu0 0
        %437 = vmatpush1.bf16.msra.mxu0 %v301
        %438 = vmatprep.subr.bf16.mxu0 0
        %439 = vmatpush1.bf16.msra.mxu0 %v302
        %440 = vmatprep.subr.bf16.mxu0 0
        %441 = vmatpush1.bf16.msra.mxu0 0
        %442 = vmatprep.subr.bf16.mxu0 0
        %443 = vmatpush1.bf16.msra.mxu0 0
        %444 = vmatprep.subr.bf16.mxu0 0
        %445 = vmatpush1.bf16.msra.mxu0 0
        %446 = vmatprep.subr.bf16.mxu0 0
        %447 = vmatpush1.bf16.msra.mxu0 0
        %448 = vmatprep.subr.bf16.mxu0 0
        %449 = vmatpush1.bf16.msra.mxu0 0
        %450 = vmatprep.subr.bf16.mxu0 0
        %451 = vmatpush1.bf16.msra.mxu0 0
        %452 = vmatprep.subr.bf16.mxu0 0
        %453 = vmatpush1.bf16.msra.mxu0 0
        %454 = vmatprep.subr.bf16.mxu0 0
        %455 = vmatpush1.bf16.msra.mxu0 0
        %456 = vmatprep.subr.bf16.mxu0 0
        %457 = vmatpush1.bf16.msra.mxu0 0
        %458 = vmatprep.subr.bf16.mxu0 0
        %459 = vmatpush1.bf16.msra.mxu0 0
        %460 = vmatprep.subr.bf16.mxu0 0
        %461 = vmatpush1.bf16.msra.mxu0 0
        %462 = vmatprep.subr.bf16.mxu0 0
        %463 = vmatpush1.bf16.msra.mxu0 0
        %464 = vmatprep.subr.bf16.mxu0 0
        %465 = vmatpush1.bf16.msra.mxu0 0
        %466 = vmatprep.subr.bf16.mxu0 0
        %467 = vmatpush1.bf16.msra.mxu0 0
        %468 = vmatprep.mubr.bf16.mxu0 0
        %469 = vmatmul.mubr.bf16.gmra.mrb[0].mxu0 %v419
        %v470 = vpop.f32.mrb[0].mxu0
        %v471 = vadd.f32 %v330, %v470
        %v472 = vpop.f32.mrb[0].mxu0
        %v473 = vpop.f32.mrb[0].mxu0
        %v474 = vadd.f32 %v335, %v473
        %v475 = vpop.f32.mrb[0].mxu0
        %476 = vmatprep.mubr.bf16.mxu0 0
        %477 = vmatmul.mubr.bf16.gmra.mrb[0].mxu0 %v422
        %v478 = vpop.f32.mrb[0].mxu0
        %v479 = vadd.f32 %v340, %v478
        %v480 = vpop.f32.mrb[0].mxu0
        %v481 = vpop.f32.mrb[0].mxu0
        %v482 = vadd.f32 %v345, %v481
        %v483 = vpop.f32.mrb[0].mxu0
        %484 = vmatprep.mubr.bf16.mxu0 0
        %485 = vmatmul.mubr.bf16.gmra.mrb[0].mxu0 %v425
        %v486 = vpop.f32.mrb[0].mxu0
        %v487 = vadd.f32 %v350, %v486
        %v488 = vpop.f32.mrb[0].mxu0
        %v489 = vpop.f32.mrb[0].mxu0
        %v490 = vadd.f32 %v355, %v489
        %v491 = vpop.f32.mrb[0].mxu0
        %492 = vmatprep.mubr.bf16.mxu0 0
        %493 = vmatmul.mubr.bf16.gmra.mrb[0].mxu0 %v428
        %v494 = vpop.f32.mrb[0].mxu0
        %v495 = vadd.f32 %v360, %v494
        %v496 = vpop.f32.mrb[0].mxu0
        %v497 = vpop.f32.mrb[0].mxu0
        %v498 = vadd.f32 %v365, %v497
        %v499 = vpop.f32.mrb[0].mxu0
        %500 = vmatprep.mubr.bf16.mxu0 0
        %501 = vmatmul.mubr.bf16.gmra.mrb[0].mxu0 %v431
        %v502 = vpop.f32.mrb[0].mxu0
        %v503 = vadd.f32 %v370, %v502
        %v504 = vpop.f32.mrb[0].mxu0
        %v505 = vpop.f32.mrb[0].mxu0
        %v506 = vadd.f32 %v375, %v505
        %v507 = vpop.f32.mrb[0].mxu0
        %508 = vmatprep.mubr.bf16.mxu0 0
        %509 = vmatmul.mubr.bf16.gmra.mrb[0].mxu0 %v434
        %v510 = vpop.f32.mrb[0].mxu0
        %v511 = vadd.f32 %v380, %v510
        %v512 = vpop.f32.mrb[0].mxu0
        %v513 = vpop.f32.mrb[0].mxu0
        %v514 = vadd.f32 %v385, %v513
        %v515 = vpop.f32.mrb[0].mxu0
        %516 = vdwg.mxu0
        %517 = vxpose.xlu0.b32.start [1/16] %v471, 128
        %518 = vxpose.xlu0.b32.cont [2/16] 0.0, 128
        %519 = vxpose.xlu0.b32.cont [3/16] 0.0, 128
        %520 = vxpose.xlu0.b32.cont [4/16] 0.0, 128
        %521 = vxpose.xlu0.b32.cont [5/16] 0.0, 128
        %522 = vxpose.xlu0.b32.cont [6/16] 0.0, 128
        %523 = vxpose.xlu0.b32.cont [7/16] 0.0, 128
        %524 = vxpose.xlu0.b32.cont [8/16] 0.0, 128
        %525 = vxpose.xlu0.b32.cont [9/16] 0.0, 128
        %526 = vxpose.xlu0.b32.cont [10/16] 0.0, 128
        %527 = vxpose.xlu0.b32.cont [11/16] 0.0, 128
        %528 = vxpose.xlu0.b32.cont [12/16] 0.0, 128
        %529 = vxpose.xlu0.b32.cont [13/16] 0.0, 128
        %530 = vxpose.xlu0.b32.cont [14/16] 0.0, 128
        %531 = vxpose.xlu0.b32.cont [15/16] 0.0, 128
        %532 = vxpose.xlu0.b32.end [16/16] 0.0, 128
        %v533 = vpop.trf.xlu0
        %v534 = vpop.trf.xlu0
        %v535 = vpop.trf.xlu0
        %v536 = vpop.trf.xlu0
        %v537 = vpop.trf.xlu0
        %v538 = vpop.trf.xlu0
        %v539 = vpop.trf.xlu0
        %v540 = vpop.trf.xlu0
        %v541 = vpop.trf.xlu0
        %v542 = vpop.trf.xlu0
        %v543 = vpop.trf.xlu0
        %v544 = vpop.trf.xlu0
        %v545 = vpop.trf.xlu0
        %v546 = vpop.trf.xlu0
        %v547 = vpop.trf.xlu0
        %v548 = vpop.trf.xlu0
        %549 = vxpose.xlu0.b32.start [1/16] %v474, 128
        %550 = vxpose.xlu0.b32.cont [2/16] 0.0, 128
        %551 = vxpose.xlu0.b32.cont [3/16] 0.0, 128
        %552 = vxpose.xlu0.b32.cont [4/16] 0.0, 128
        %553 = vxpose.xlu0.b32.cont [5/16] 0.0, 128
        %554 = vxpose.xlu0.b32.cont [6/16] 0.0, 128
        %555 = vxpose.xlu0.b32.cont [7/16] 0.0, 128
        %556 = vxpose.xlu0.b32.cont [8/16] 0.0, 128
        %557 = vxpose.xlu0.b32.cont [9/16] 0.0, 128
        %558 = vxpose.xlu0.b32.cont [10/16] 0.0, 128
        %559 = vxpose.xlu0.b32.cont [11/16] 0.0, 128
        %560 = vxpose.xlu0.b32.cont [12/16] 0.0, 128
        %561 = vxpose.xlu0.b32.cont [13/16] 0.0, 128
        %562 = vxpose.xlu0.b32.cont [14/16] 0.0, 128
        %563 = vxpose.xlu0.b32.cont [15/16] 0.0, 128
        %564 = vxpose.xlu0.b32.end [16/16] 0.0, 128
        %v565 = vpop.trf.xlu0
        %v566 = vpop.trf.xlu0
        %v567 = vpop.trf.xlu0
        %v568 = vpop.trf.xlu0
        %v569 = vpop.trf.xlu0
        %v570 = vpop.trf.xlu0
        %v571 = vpop.trf.xlu0
        %v572 = vpop.trf.xlu0
        %v573 = vpop.trf.xlu0
        %v574 = vpop.trf.xlu0
        %v575 = vpop.trf.xlu0
        %v576 = vpop.trf.xlu0
        %v577 = vpop.trf.xlu0
        %v578 = vpop.trf.xlu0
        %v579 = vpop.trf.xlu0
        %v580 = vpop.trf.xlu0
        %581 = vxpose.xlu0.b32.start [1/16] %v479, 128
        %582 = vxpose.xlu0.b32.cont [2/16] 0.0, 128
        %583 = vxpose.xlu0.b32.cont [3/16] 0.0, 128
        %584 = vxpose.xlu0.b32.cont [4/16] 0.0, 128
        %585 = vxpose.xlu0.b32.cont [5/16] 0.0, 128
        %586 = vxpose.xlu0.b32.cont [6/16] 0.0, 128
        %587 = vxpose.xlu0.b32.cont [7/16] 0.0, 128
        %588 = vxpose.xlu0.b32.cont [8/16] 0.0, 128
        %589 = vxpose.xlu0.b32.cont [9/16] 0.0, 128
        %590 = vxpose.xlu0.b32.cont [10/16] 0.0, 128
        %591 = vxpose.xlu0.b32.cont [11/16] 0.0, 128
        %592 = vxpose.xlu0.b32.cont [12/16] 0.0, 128
        %593 = vxpose.xlu0.b32.cont [13/16] 0.0, 128
        %594 = vxpose.xlu0.b32.cont [14/16] 0.0, 128
        %595 = vxpose.xlu0.b32.cont [15/16] 0.0, 128
        %596 = vxpose.xlu0.b32.end [16/16] 0.0, 128
        %v597 = vpop.trf.xlu0
        %v598 = vpop.trf.xlu0
        %v599 = vpop.trf.xlu0
        %v600 = vpop.trf.xlu0
        %v601 = vpop.trf.xlu0
        %v602 = vpop.trf.xlu0
        %v603 = vpop.trf.xlu0
        %v604 = vpop.trf.xlu0
        %v605 = vpop.trf.xlu0
        %v606 = vpop.trf.xlu0
        %v607 = vpop.trf.xlu0
        %v608 = vpop.trf.xlu0
        %v609 = vpop.trf.xlu0
        %v610 = vpop.trf.xlu0
        %v611 = vpop.trf.xlu0
        %v612 = vpop.trf.xlu0
        %613 = vxpose.xlu0.b32.start [1/16] %v482, 128
        %614 = vxpose.xlu0.b32.cont [2/16] 0.0, 128
        %615 = vxpose.xlu0.b32.cont [3/16] 0.0, 128
        %616 = vxpose.xlu0.b32.cont [4/16] 0.0, 128
        %617 = vxpose.xlu0.b32.cont [5/16] 0.0, 128
        %618 = vxpose.xlu0.b32.cont [6/16] 0.0, 128
        %619 = vxpose.xlu0.b32.cont [7/16] 0.0, 128
        %620 = vxpose.xlu0.b32.cont [8/16] 0.0, 128
        %621 = vxpose.xlu0.b32.cont [9/16] 0.0, 128
        %622 = vxpose.xlu0.b32.cont [10/16] 0.0, 128
        %623 = vxpose.xlu0.b32.cont [11/16] 0.0, 128
        %624 = vxpose.xlu0.b32.cont [12/16] 0.0, 128
        %625 = vxpose.xlu0.b32.cont [13/16] 0.0, 128
        %626 = vxpose.xlu0.b32.cont [14/16] 0.0, 128
        %627 = vxpose.xlu0.b32.cont [15/16] 0.0, 128
        %628 = vxpose.xlu0.b32.end [16/16] 0.0, 128
        %v629 = vpop.trf.xlu0
        %v630 = vpop.trf.xlu0
        %v631 = vpop.trf.xlu0
        %v632 = vpop.trf.xlu0
        %v633 = vpop.trf.xlu0
        %v634 = vpop.trf.xlu0
        %v635 = vpop.trf.xlu0
        %v636 = vpop.trf.xlu0
        %v637 = vpop.trf.xlu0
        %v638 = vpop.trf.xlu0
        %v639 = vpop.trf.xlu0
        %v640 = vpop.trf.xlu0
        %v641 = vpop.trf.xlu0
        %v642 = vpop.trf.xlu0
        %v643 = vpop.trf.xlu0
        %v644 = vpop.trf.xlu0
        %v645 = vpack.c.bf16 %v533, %v533
        %v646 = vpack.c.bf16 %v565, %v565
        %v647 = vpack.c.bf16 %v597, %v597
        %v648 = vpack.c.bf16 %v629, %v629
        %vm649 = vcmask 60416
        %650 = vst.msk [vmem:[%s245] sm:$0xf] %vm649, %v645
        %651 = vst.msk [vmem:[%s245 + $0x4] sm:$0xf] %vm649, %v646
        %652 = vst.msk [vmem:[%s245 + $0x8] sm:$0xf] %vm649, %v647
        %653 = vst.msk [vmem:[%s245 + $0xc] sm:$0xf] %vm649, %v648
        %v654 = vpack.c.bf16 %v487, %v487
        %v655 = vpack.c.bf16 %v490, %v490
        %v656 = vpack.c.bf16 %v495, %v495
        %v657 = vpack.c.bf16 %v498, %v498
        %658 = vst.msk [vmem:[%s252] sm:$0xf] %vm649, %v654
        %659 = vst.msk [vmem:[%s252 + $0x4] sm:$0xf] %vm649, %v655
        %660 = vst.msk [vmem:[%s252 + $0x8] sm:$0xf] %vm649, %v656
        %661 = vst.msk [vmem:[%s252 + $0xc] sm:$0xf] %vm649, %v657
        %662 = vxpose.xlu0.b32.start [1/16] %v503, 128
        %663 = vxpose.xlu0.b32.cont [2/16] 0.0, 128
        %664 = vxpose.xlu0.b32.cont [3/16] 0.0, 128
        %665 = vxpose.xlu0.b32.cont [4/16] 0.0, 128
        %666 = vxpose.xlu0.b32.cont [5/16] 0.0, 128
        %667 = vxpose.xlu0.b32.cont [6/16] 0.0, 128
        %668 = vxpose.xlu0.b32.cont [7/16] 0.0, 128
        %669 = vxpose.xlu0.b32.cont [8/16] 0.0, 128
        %670 = vxpose.xlu0.b32.cont [9/16] 0.0, 128
        %671 = vxpose.xlu0.b32.cont [10/16] 0.0, 128
        %672 = vxpose.xlu0.b32.cont [11/16] 0.0, 128
        %673 = vxpose.xlu0.b32.cont [12/16] 0.0, 128
        %674 = vxpose.xlu0.b32.cont [13/16] 0.0, 128
        %675 = vxpose.xlu0.b32.cont [14/16] 0.0, 128
        %676 = vxpose.xlu0.b32.cont [15/16] 0.0, 128
        %677 = vxpose.xlu0.b32.end [16/16] 0.0, 128
        %v678 = vpop.trf.xlu0
        %v679 = vpop.trf.xlu0
        %v680 = vpop.trf.xlu0
        %v681 = vpop.trf.xlu0
        %v682 = vpop.trf.xlu0
        %v683 = vpop.trf.xlu0
        %v684 = vpop.trf.xlu0
        %v685 = vpop.trf.xlu0
        %v686 = vpop.trf.xlu0
        %v687 = vpop.trf.xlu0
        %v688 = vpop.trf.xlu0
        %v689 = vpop.trf.xlu0
        %v690 = vpop.trf.xlu0
        %v691 = vpop.trf.xlu0
        %v692 = vpop.trf.xlu0
        %v693 = vpop.trf.xlu0
        %694 = vxpose.xlu0.b32.start [1/16] %v506, 128
        %695 = vxpose.xlu0.b32.cont [2/16] 0.0, 128
        %696 = vxpose.xlu0.b32.cont [3/16] 0.0, 128
        %697 = vxpose.xlu0.b32.cont [4/16] 0.0, 128
        %698 = vxpose.xlu0.b32.cont [5/16] 0.0, 128
        %699 = vxpose.xlu0.b32.cont [6/16] 0.0, 128
        %700 = vxpose.xlu0.b32.cont [7/16] 0.0, 128
        %701 = vxpose.xlu0.b32.cont [8/16] 0.0, 128
        %702 = vxpose.xlu0.b32.cont [9/16] 0.0, 128
        %703 = vxpose.xlu0.b32.cont [10/16] 0.0, 128
        %704 = vxpose.xlu0.b32.cont [11/16] 0.0, 128
        %705 = vxpose.xlu0.b32.cont [12/16] 0.0, 128
        %706 = vxpose.xlu0.b32.cont [13/16] 0.0, 128
        %707 = vxpose.xlu0.b32.cont [14/16] 0.0, 128
        %708 = vxpose.xlu0.b32.cont [15/16] 0.0, 128
        %709 = vxpose.xlu0.b32.end [16/16] 0.0, 128
        %v710 = vpop.trf.xlu0
        %v711 = vpop.trf.xlu0
        %v712 = vpop.trf.xlu0
        %v713 = vpop.trf.xlu0
        %v714 = vpop.trf.xlu0
        %v715 = vpop.trf.xlu0
        %v716 = vpop.trf.xlu0
        %v717 = vpop.trf.xlu0
        %v718 = vpop.trf.xlu0
        %v719 = vpop.trf.xlu0
        %v720 = vpop.trf.xlu0
        %v721 = vpop.trf.xlu0
        %v722 = vpop.trf.xlu0
        %v723 = vpop.trf.xlu0
        %v724 = vpop.trf.xlu0
        %v725 = vpop.trf.xlu0
        %726 = vxpose.xlu0.b32.start [1/16] %v511, 128
        %727 = vxpose.xlu0.b32.cont [2/16] 0.0, 128
        %728 = vxpose.xlu0.b32.cont [3/16] 0.0, 128
        %729 = vxpose.xlu0.b32.cont [4/16] 0.0, 128
        %730 = vxpose.xlu0.b32.cont [5/16] 0.0, 128
        %731 = vxpose.xlu0.b32.cont [6/16] 0.0, 128
        %732 = vxpose.xlu0.b32.cont [7/16] 0.0, 128
        %733 = vxpose.xlu0.b32.cont [8/16] 0.0, 128
        %734 = vxpose.xlu0.b32.cont [9/16] 0.0, 128
        %735 = vxpose.xlu0.b32.cont [10/16] 0.0, 128
        %736 = vxpose.xlu0.b32.cont [11/16] 0.0, 128
        %737 = vxpose.xlu0.b32.cont [12/16] 0.0, 128
        %738 = vxpose.xlu0.b32.cont [13/16] 0.0, 128
        %739 = vxpose.xlu0.b32.cont [14/16] 0.0, 128
        %740 = vxpose.xlu0.b32.cont [15/16] 0.0, 128
        %741 = vxpose.xlu0.b32.end [16/16] 0.0, 128
        %v742 = vpop.trf.xlu0
        %v743 = vpop.trf.xlu0
        %v744 = vpop.trf.xlu0
        %v745 = vpop.trf.xlu0
        %v746 = vpop.trf.xlu0
        %v747 = vpop.trf.xlu0
        %v748 = vpop.trf.xlu0
        %v749 = vpop.trf.xlu0
        %v750 = vpop.trf.xlu0
        %v751 = vpop.trf.xlu0
        %v752 = vpop.trf.xlu0
        %v753 = vpop.trf.xlu0
        %v754 = vpop.trf.xlu0
        %v755 = vpop.trf.xlu0
        %v756 = vpop.trf.xlu0
        %v757 = vpop.trf.xlu0
        %758 = vxpose.xlu0.b32.start [1/16] %v514, 128
        %759 = vxpose.xlu0.b32.cont [2/16] 0.0, 128
        %760 = vxpose.xlu0.b32.cont [3/16] 0.0, 128
        %761 = vxpose.xlu0.b32.cont [4/16] 0.0, 128
        %762 = vxpose.xlu0.b32.cont [5/16] 0.0, 128
        %763 = vxpose.xlu0.b32.cont [6/16] 0.0, 128
        %764 = vxpose.xlu0.b32.cont [7/16] 0.0, 128
        %765 = vxpose.xlu0.b32.cont [8/16] 0.0, 128
        %766 = vxpose.xlu0.b32.cont [9/16] 0.0, 128
        %767 = vxpose.xlu0.b32.cont [10/16] 0.0, 128
        %768 = vxpose.xlu0.b32.cont [11/16] 0.0, 128
        %769 = vxpose.xlu0.b32.cont [12/16] 0.0, 128
        %770 = vxpose.xlu0.b32.cont [13/16] 0.0, 128
        %771 = vxpose.xlu0.b32.cont [14/16] 0.0, 128
        %772 = vxpose.xlu0.b32.cont [15/16] 0.0, 128
        %773 = vxpose.xlu0.b32.end [16/16] 0.0, 128
        %v774 = vpop.trf.xlu0
        %v775 = vpop.trf.xlu0
        %v776 = vpop.trf.xlu0
        %v777 = vpop.trf.xlu0
        %v778 = vpop.trf.xlu0
        %v779 = vpop.trf.xlu0
        %v780 = vpop.trf.xlu0
        %v781 = vpop.trf.xlu0
        %v782 = vpop.trf.xlu0
        %v783 = vpop.trf.xlu0
        %v784 = vpop.trf.xlu0
        %v785 = vpop.trf.xlu0
        %v786 = vpop.trf.xlu0
        %v787 = vpop.trf.xlu0
        %v788 = vpop.trf.xlu0
        %v789 = vpop.trf.xlu0
        %v790 = vpack.c.bf16 %v678, %v678
        %v791 = vpack.c.bf16 %v710, %v710
        %v792 = vpack.c.bf16 %v742, %v742
        %v793 = vpack.c.bf16 %v774, %v774
        %794 = vst.msk [vmem:[%s259] sm:$0xf] %vm649, %v790
        %795 = vst.msk [vmem:[%s259 + $0x4] sm:$0xf] %vm649, %v791
        %796 = vst.msk [vmem:[%s259 + $0x8] sm:$0xf] %vm649, %v792
        %797 = vst.msk [vmem:[%s259 + $0xc] sm:$0xf] %vm649, %v793
        %s798 = sand.u32 %s115, 1
        %s799 = scalar_lea.sflag [#allocation3], %s798
        %s800 = sand.u32 %s115, 1
        %s801 = smul.addr %s800, 16
        %s802 = scalar_lea.vmem [#allocation2], %s801
        %s803 = sand.u32 %s23, 1
        %s804 = scalar_lea.sflag [#allocation5], %s803
        %s805 = sand.u32 %s143, 1
        %s806 = smul.addr %s805, 16
        %s807 = scalar_lea.vmem [#allocation4], %s806
        %s808 = sand.u32 %s23, 1
        %s809 = scalar_lea.sflag [#allocation5], %s808
        %s810 = sand.u32 %s171, 1
        %s811 = smul.addr %s810, 16
        %s812 = scalar_lea.vmem [#allocation6], %s811
        // Predicated region
        $region33: #{tpu_custom_call.1} parent=31 // pred_check
          %p813 = pneg %p125
        $region34: #{tpu_custom_call.1} parent=31 // pred_check_branch
          %815 = sbr.rel (%p813) target = $region36
        $region35: #{tpu_custom_call.1} parent=31 // pred_region
          %s817 = ssub.s32 256, 256
          %818 = vsyncadd %s799, %s817
          %s819 = smul.addr %s27, 4
          %s820 = sadd.s32 %s28, %s819
          %s821 = smul.addr %s820, 64
          %s822 = scalar_lea.hbm %s3, %s821
          %s823 = sshll.u32 %s802, 4
          %s824 = int_to_ptr.vmem [resolvable:$true] %s823
          %829 = dma.vmem_to_hbm [thread:$0]  %s824, 256, %s822, %s799, 64, 64, 4
        $region36: #{tpu_custom_call.1} parent=31 // pred_fallthru
          _
        // Predicated region
        $region37: #{tpu_custom_call.1} parent=31 // pred_check
          %p830 = pneg %p153
        $region38: #{tpu_custom_call.1} parent=31 // pred_check_branch
          %832 = sbr.rel (%p830) target = $region40
        $region39: #{tpu_custom_call.1} parent=31 // pred_region
          %s834 = ssub.s32 256, 256
          %835 = vsyncadd %s804, %s834
          %s836 = smul.addr %s27, 4
          %s837 = sadd.s32 %s28, %s836
          %s838 = smul.addr %s837, 64
          %s839 = scalar_lea.hbm %s4, %s838
          %s840 = sshll.u32 %s807, 4
          %s841 = int_to_ptr.vmem [resolvable:$true] %s840
          %846 = dma.vmem_to_hbm [thread:$0]  %s841, 256, %s839, %s804, 64, 64, 4
        $region40: #{tpu_custom_call.1} parent=31 // pred_fallthru
          _
        // Predicated region
        $region41: #{tpu_custom_call.1} parent=31 // pred_check
          %p847 = pneg %p181
        $region42: #{tpu_custom_call.1} parent=31 // pred_check_branch
          %849 = sbr.rel (%p847) target = $region44
        $region43: #{tpu_custom_call.1} parent=31 // pred_region
          %s851 = ssub.s32 256, 256
          %852 = vsyncadd %s809, %s851
          %s853 = smul.addr %s27, 4
          %s854 = sadd.s32 %s28, %s853
          %s855 = smul.addr %s854, 64
          %s856 = scalar_lea.hbm %s5, %s855
          %s857 = sshll.u32 %s812, 4
          %s858 = int_to_ptr.vmem [resolvable:$true] %s857
          %863 = dma.vmem_to_hbm [thread:$0]  %s858, 256, %s856, %s809, 64, 64, 4
        $region44: #{tpu_custom_call.1} parent=31 // pred_fallthru
          _
      $region32: #{tpu_custom_call.1} parent=5 // pred_fallthru
        _
      %p864 = scmp.le.s32.totalorder 2, %s18
      // Predicated region
      $region45: #{tpu_custom_call.1} parent=5 // pred_check
        %p865 = pneg %p864
      $region46: #{tpu_custom_call.1} parent=5 // pred_check_branch
        %867 = sbr.rel (%p865) target = $region48
      $region47: #{tpu_custom_call.1} parent=5 // pred_region
        %s868 = ssub.s32 %s18, 2
        // Predicated region
        $region49: #{tpu_custom_call.1} parent=47 // pred_check
          %p869 = pneg %p131
        $region50: #{tpu_custom_call.1} parent=47 // pred_check_branch
          %871 = sbr.rel (%p869) target = $region52
        $region51: #{tpu_custom_call.1} parent=47 // pred_region
          %s872 = sand.u32 %s116, 1
          %s873 = scalar_lea.sflag [#allocation3], %s872
          %s874 = sand.u32 %s116, 1
          %s875 = smul.addr %s874, 16
          %s876 = scalar_lea.vmem [#allocation2], %s875
          %877 = dma.done %s873, 256
        $region52: #{tpu_custom_call.1} parent=47 // pred_fallthru
          _
        // Predicated region
        $region53: #{tpu_custom_call.1} parent=47 // pred_check
          %p878 = pneg %p159
        $region54: #{tpu_custom_call.1} parent=47 // pred_check_branch
          %880 = sbr.rel (%p878) target = $region56
        $region55: #{tpu_custom_call.1} parent=47 // pred_region
          %s881 = sand.u32 %s24, 1
          %s882 = scalar_lea.sflag [#allocation5], %s881
          %s883 = sand.u32 %s144, 1
          %s884 = smul.addr %s883, 16
          %s885 = scalar_lea.vmem [#allocation4], %s884
          %886 = dma.done %s882, 256
        $region56: #{tpu_custom_call.1} parent=47 // pred_fallthru
          _
        // Predicated region
        $region57: #{tpu_custom_call.1} parent=47 // pred_check
          %p887 = pneg %p187
        $region58: #{tpu_custom_call.1} parent=47 // pred_check_branch
          %889 = sbr.rel (%p887) target = $region60
        $region59: #{tpu_custom_call.1} parent=47 // pred_region
          %s890 = sand.u32 %s24, 1
          %s891 = scalar_lea.sflag [#allocation5], %s890
          %s892 = sand.u32 %s172, 1
          %s893 = smul.addr %s892, 16
          %s894 = scalar_lea.vmem [#allocation6], %s893
          %895 = dma.done %s891, 256
        $region60: #{tpu_custom_call.1} parent=47 // pred_fallthru
          _
      $region48: #{tpu_custom_call.1} parent=5 // pred_fallthru
        _
    $region6: #{tpu_custom_call.1} parent=1 // loop_footer
      %s22 = sadd.s32 1, %s18
    $region7: #{tpu_custom_call.1} parent=1 // loop_footer_branch
      %17 = sbr.rel target = $region3
    $region8: #{tpu_custom_call.1} parent=1 // loop_exit
      _
    %896 = vsyncpa [#allocation3], 1
    %s897 = scalar_lea.sflag [#allocation3], 1
    %898 = vsyncpa %s897, 1
    %899 = vsyncpa [#allocation5], 1
    %s900 = scalar_lea.sflag [#allocation5], 1
    %901 = vsyncpa %s900, 1

</llo_original>
